<compile_context>
chip_gen: v6e
topology: v6e:2x2x1
jax: 0.10.0
libtpu: 0.0.40
codegen_flags: <defaults>
</compile_context>

<pallas_src>
import functools

import jax
import jax.numpy as jnp
from jax import lax
from jax.experimental import pallas as pl
from jax.experimental.pallas import tpu as pltpu


def _round_up(v, m):
    return ((v + m - 1) // m) * m


def _conv_layer_kernel(x_ref, c_ref, wpre_ref, wos_ref, bos_ref,
                       out_ref, skip_ref, halo_ref,
                       *, K, dilation, tT, H, R, carry_halo):
    """Per (batch, time-block) kernel, NCT orientation (channels x time).

    x_ref   : (1, Cin, tT)    current time block of x
    c_ref   : (1, Ccond, tT)  conditioning block
    wpre_ref: (2R, K*Cin + Ccond + 1)  stacked [conv taps | cond 1x1 | bias]
    wos_ref : (R+S, R)        stacked [w_out ; w_skip]
    bos_ref : (R+S, 1)        stacked [b_out ; b_skip]
    halo_ref: (Cin, H) VMEM scratch carrying the causal left context
              (last H samples of the previous time block), H multiple of 128.
    """
    xcur = x_ref[0]                                        # (Cin, tT)
    ccur = c_ref[0].astype(xcur.dtype)                     # (Ccond, tT)

    if K > 1:
        if carry_halo:
            # Zero the carried halo at the first time block of every batch.
            @pl.when(pl.program_id(1) == 0)
            def _():
                halo_ref[...] = jnp.zeros_like(halo_ref)
            halo = halo_ref[...]
        else:
            # Single time block: causal left padding is just zeros.
            halo = jnp.zeros((xcur.shape[0], H), xcur.dtype)

        xext = jnp.concatenate([halo, xcur], axis=-1)      # (Cin, H + tT)

        # Tap k needs x shifted right by (K-1-k)*dilation samples.  Build the
        # shifts incrementally: one lane-roll by `dilation` per tap (XLU slot).
        # Wrap-around columns stay inside [0, H) because (K-1)*dilation <= H.
        taps = [None] * K
        taps[K - 1] = xcur                                 # zero shift
        rolled = xext
        for k in range(K - 2, -1, -1):
            rolled = pltpu.roll(rolled, shift=dilation, axis=1)
            taps[k] = rolled[:, H:]                        # (Cin, tT), aligned
        pieces = taps
    else:
        pieces = [xcur]

    # Fused pre-activation: one MXU matmul covers all conv taps, the
    # conditioning 1x1 and the merged bias (via a ones row).
    ones = jnp.ones((1, tT), xcur.dtype)
    xstack = jnp.concatenate(pieces + [ccur, ones], axis=0)  # (K*Cin+Ccond+1, tT)
    pre = jnp.dot(wpre_ref[...], xstack,
                  preferred_element_type=jnp.float32)        # (2R, tT)

    # Gated activation: rows [0, R) -> tanh, rows [R, 2R) -> sigmoid
    # (8-sublane-aligned split, no cross-lane movement).
    z = jnp.tanh(pre[:R]) * jax.nn.sigmoid(pre[R:])

    # Fused output + skip 1x1 transforms; lane-dense row-slice stores.
    y = (jnp.dot(wos_ref[...], z, preferred_element_type=jnp.float32)
         + bos_ref[...])                                     # (R+S, tT)
    out_ref[0] = y[:R].astype(out_ref.dtype)
    skip_ref[0] = y[R:].astype(skip_ref.dtype)

    if K > 1 and carry_halo:
        # Carry the causal halo (last H samples of this block) to the next one.
        halo_ref[...] = xcur[:, tT - H:]


def _pick_time_tile(T, max_tile=8192):
    """Largest multiple of 128 dividing T (capped at max_tile), else full T.

    max_tile=8192 keeps the per-block VMEM footprint at a few MB (~0.7 KB per
    time sample incl. double buffering and intermediates), safe on all
    generations including v7x's 64 MiB VMEM, while amortizing the ~0.35 us
    per-grid-step overhead (>1 MB of DMA per step at these channel widths).
    """
    if T % 128 != 0:
        return T
    cands = [t for t in range(128, min(T, max_tile) + 1, 128) if T % t == 0]
    return max(cands) if cands else T


def prepare_conv_layer_params(params, *, kernel_size):
    """One-time weight re-orientation / stacking (do NOT redo per forward call)."""
    K = kernel_size
    w_conv = params["w_conv"]                       # (2R, Cin, K)  PyTorch layout
    two_r = w_conv.shape[0]
    R = two_r // 2
    S = params["b_skip"].shape[0]
    w_cond = params["w_cond"][:, :, 0]              # (2R, Ccond)
    b_pre = (params["b_conv"] + params["b_cond"])[:, None]          # (2R, 1)
    # Stacked pre-activation weight: [tap_0 | tap_1 | ... | tap_{K-1} | cond | bias]
    w_pre = jnp.concatenate([w_conv[:, :, k] for k in range(K)]
                            + [w_cond, b_pre], axis=1)              # (2R, K*Cin+Ccond+1)
    # Stacked 1x1 output/skip weights and biases.
    w_os = jnp.concatenate([params["w_out"][:, :, 0],
                            params["w_skip"][:, :, 0]], axis=0)     # (R+S, R)
    b_os = jnp.concatenate([params["b_out"], params["b_skip"]])[:, None]  # (R+S, 1)
    return {"w_pre": w_pre, "w_os": w_os, "b_os": b_os, "R": R, "S": S}


def convolution_layer_forward(x, cond, prepared, *, kernel_size, dilation,
                              time_tile=None):
    """x: (B, Cin, T), cond: (B, Ccond, T)  ->  (out (B,R,T), skip (B,S,T))."""
    B, Cin, T = x.shape
    Ccond = cond.shape[1]
    K = kernel_size
    R, S = prepared["R"], prepared["S"]
    w_pre, w_os, b_os = prepared["w_pre"], prepared["w_os"], prepared["b_os"]
    KC = w_pre.shape[1]                             # K*Cin + Ccond + 1

    tT = _pick_time_tile(T) if time_tile is None else time_tile
    if T % tT != 0:
        raise ValueError(f"time_tile {tT} must divide T={T}")
    nT = T // tT
    P = (K - 1) * dilation
    H = max(128, _round_up(P, 128)) if K > 1 else 128   # lane-aligned halo width
    carry_halo = (K > 1) and (nT > 1)
    if carry_halo and H > tT:
        raise ValueError(
            f"receptive field (K-1)*dilation={P} (halo {H}) must fit in one "
            f"time tile {tT}")

    kernel = functools.partial(_conv_layer_kernel, K=K, dilation=dilation,
                               tT=tT, H=H, R=R, carry_halo=carry_halo)

    out, skip = pl.pallas_call(
        kernel,
        out_shape=(jax.ShapeDtypeStruct((B, R, T), x.dtype),
                   jax.ShapeDtypeStruct((B, S, T), x.dtype)),
        grid_spec=pltpu.PrefetchScalarGridSpec(
            num_scalar_prefetch=0,
            grid=(B, nT),
            in_specs=[
                pl.BlockSpec((1, Cin, tT), lambda b, i: (b, 0, i)),
                pl.BlockSpec((1, Ccond, tT), lambda b, i: (b, 0, i)),
                pl.BlockSpec((2 * R, KC), lambda b, i: (0, 0)),
                pl.BlockSpec((R + S, R), lambda b, i: (0, 0)),
                pl.BlockSpec((R + S, 1), lambda b, i: (0, 0)),
            ],
            out_specs=[
                pl.BlockSpec((1, R, tT), lambda b, i: (b, 0, i)),
                pl.BlockSpec((1, S, tT), lambda b, i: (b, 0, i)),
            ],
            # Causal halo carried across time blocks (re-zeroed at i == 0).
            scratch_shapes=[pltpu.VMEM((Cin, H), x.dtype)],
        ),
        compiler_params=pltpu.CompilerParams(
            # Time axis must stay sequential (scratch-carried halo); batch is
            # parallel so both v7x TensorCores get work when B >= 2.
            dimension_semantics=("parallel", "arbitrary"),
            vmem_limit_bytes=48 * 1024 * 1024),
    )(x, cond, w_pre, w_os, b_os)

    return out, skip


def reference_forward(x, cond, params, *, kernel_size, dilation):
    """Pure-JAX reference matching ConvolutionLayer._forward_native."""
    R = params["b_out"].shape[0]
    P = (kernel_size - 1) * dilation
    xp = jnp.pad(x, ((0, 0), (0, 0), (P, 0)))
    pre = lax.conv_general_dilated(
        xp, params["w_conv"], window_strides=(1,), padding="VALID",
        rhs_dilation=(dilation,), dimension_numbers=("NCH", "OIH", "NCH"))
    pre = pre + params["b_conv"][None, :, None]
    cproj = jnp.einsum("oc,bct->bot", params["w_cond"][:, :, 0], cond)
    pre = pre + cproj + params["b_cond"][None, :, None]
    z = jnp.tanh(pre[:, :R]) * jax.nn.sigmoid(pre[:, R:])
    skip = jnp.einsum("sr,brt->bst", params["w_skip"][:, :, 0], z) \
        + params["b_skip"][None, :, None]
    out = jnp.einsum("or,brt->bot", params["w_out"][:, :, 0], z) \
        + params["b_out"][None, :, None]
    return out, skip


if __name__ == "__main__":
    # Module configuration (gated activation => channel_mul = 2).
    B, Cin, T = 2, 4, 2048
    R = 8            # out_channels == residual_channels (multiple of 8)
    S = 16           # skip_channels (multiple of 8)
    Ccond = 5        # cond_channels
    K = 3            # kernel_size
    DIL = 2          # dilation

    key = jax.random.PRNGKey(0)
    keys = jax.random.split(key, 10)
    scale = 0.1
    params = {
        "w_conv": scale * jax.random.normal(keys[0], (2 * R, Cin, K), jnp.float32),
        "b_conv": scale * jax.random.normal(keys[1], (2 * R,), jnp.float32),
        "w_cond": scale * jax.random.normal(keys[2], (2 * R, Ccond, 1), jnp.float32),
        "b_cond": scale * jax.random.normal(keys[3], (2 * R,), jnp.float32),
        "w_out": scale * jax.random.normal(keys[4], (R, R, 1), jnp.float32),
        "b_out": scale * jax.random.normal(keys[5], (R,), jnp.float32),
        "w_skip": scale * jax.random.normal(keys[6], (S, R, 1), jnp.float32),
        "b_skip": scale * jax.random.normal(keys[7], (S,), jnp.float32),
    }
    x = jax.random.normal(keys[8], (B, Cin, T), jnp.float32)       # (batch, channels, time)
    cond = jax.random.normal(keys[9], (B, Ccond, T), jnp.float32)  # (batch, cond_channels, time)

    prepared = prepare_conv_layer_params(params, kernel_size=K)    # one-time prep
    out_ref, skip_ref = reference_forward(x, cond, params,
                                          kernel_size=K, dilation=DIL)

    # 1) Default tiling (T fits in one tile here -> single block per batch).
    out, skip = convolution_layer_forward(x, cond, prepared,
                                          kernel_size=K, dilation=DIL)
    jax.block_until_ready((out, skip))
    assert out.shape == (B, R, T) and skip.shape == (B, S, T)
    assert jnp.allclose(out, out_ref, atol=1e-4, rtol=1e-4)
    assert jnp.allclose(skip, skip_ref, atol=1e-4, rtol=1e-4)

    # 2) Forced small tile to exercise the scratch-carried causal halo path.
    out2, skip2 = convolution_layer_forward(x, cond, prepared,
                                            kernel_size=K, dilation=DIL,
                                            time_tile=512)
    jax.block_until_ready((out2, skip2))
    assert jnp.allclose(out2, out_ref, atol=1e-4, rtol=1e-4)
    assert jnp.allclose(skip2, skip_ref, atol=1e-4, rtol=1e-4)

    print("KERNEL_OK")
</pallas_src>

<mosaic_0001>
module attributes {stable_mosaic.version = 11 : i64} {
  func.func @_conv_layer_kernel(%arg0: i32, %arg1: i32, %arg2: memref<1x4x2048xf32, #tpu.memory_space<vmem>>, %arg3: memref<1x5x2048xf32, #tpu.memory_space<vmem>>, %arg4: memref<16x18xf32, #tpu.memory_space<vmem>>, %arg5: memref<24x8xf32, #tpu.memory_space<vmem>>, %arg6: memref<24x1xf32, #tpu.memory_space<vmem>>, %arg7: memref<1x8x2048xf32, #tpu.memory_space<vmem>>, %arg8: memref<1x16x2048xf32, #tpu.memory_space<vmem>>, %arg9: memref<4x128xf32, #tpu.memory_space<vmem>>) attributes {dimension_semantics = [#tpu.dimension_semantics<parallel>, #tpu.dimension_semantics<arbitrary>], iteration_bounds = array<i64: 2, 1>, scalar_prefetch = 0 : i64, scratch_operands = 1 : i64, tpu.core_type = #tpu.core_type<tc>, window_params = [{transform_indices = @transform_0, window_bounds = array<i64: 1, 4, 2048>}, {transform_indices = @transform_1, window_bounds = array<i64: 1, 5, 2048>}, {pipeline_mode = #tpu.pipeline_mode<synchronous>, transform_indices = @transform_2, window_bounds = array<i64: 16, 18>}, {pipeline_mode = #tpu.pipeline_mode<synchronous>, transform_indices = @transform_3, window_bounds = array<i64: 24, 8>}, {pipeline_mode = #tpu.pipeline_mode<synchronous>, transform_indices = @transform_4, window_bounds = array<i64: 24, 1>}, {transform_indices = @transform_5, window_bounds = array<i64: 1, 8, 2048>}, {transform_indices = @transform_6, window_bounds = array<i64: 1, 16, 2048>}]} {
    %c0 = arith.constant 0 : index
    %c0_0 = arith.constant 0 : index
    %c0_1 = arith.constant 0 : index
    %0 = vector.load %arg2[%c0, %c0_0, %c0_1] : memref<1x4x2048xf32, #tpu.memory_space<vmem>>, vector<1x4x2048xf32>
    %1 = vector.shape_cast %0 : vector<1x4x2048xf32> to vector<4x2048xf32>
    %c0_2 = arith.constant 0 : index
    %c0_3 = arith.constant 0 : index
    %c0_4 = arith.constant 0 : index
    %2 = vector.load %arg3[%c0_2, %c0_3, %c0_4] : memref<1x5x2048xf32, #tpu.memory_space<vmem>>, vector<1x5x2048xf32>
    %3 = vector.shape_cast %2 : vector<1x5x2048xf32> to vector<5x2048xf32>
    %cst = arith.constant 0.000000e+00 : f32
    %4 = vector.broadcast %cst : f32 to vector<4x128xf32>
    %5 = tpu.concatenate %4, %1 in 1 : vector<4x128xf32>, vector<4x2048xf32> -> vector<4x2176xf32>
    %c2_i32 = arith.constant 2 : i32
    %6 = tpu.dynamic_rotate %5 by %c2_i32 dim 1 : vector<4x2176xf32>, i32 -> vector<4x2176xf32>
    %7 = vector.extract_strided_slice %6 {offsets = [0, 128], sizes = [4, 2048], strides = [1, 1]} : vector<4x2176xf32> to vector<4x2048xf32>
    %c2_i32_5 = arith.constant 2 : i32
    %8 = tpu.dynamic_rotate %6 by %c2_i32_5 dim 1 : vector<4x2176xf32>, i32 -> vector<4x2176xf32>
    %9 = vector.extract_strided_slice %8 {offsets = [0, 128], sizes = [4, 2048], strides = [1, 1]} : vector<4x2176xf32> to vector<4x2048xf32>
    %cst_6 = arith.constant 1.000000e+00 : f32
    %10 = vector.broadcast %cst_6 : f32 to vector<1x2048xf32>
    %11 = tpu.concatenate %9, %7, %1, %3, %10 in 0 : vector<4x2048xf32>, vector<4x2048xf32>, vector<4x2048xf32>, vector<5x2048xf32>, vector<1x2048xf32> -> vector<18x2048xf32>
    %c0_7 = arith.constant 0 : index
    %c0_8 = arith.constant 0 : index
    %12 = vector.load %arg4[%c0_7, %c0_8] : memref<16x18xf32, #tpu.memory_space<vmem>>, vector<16x18xf32>
    %cst_9 = arith.constant dense<0.000000e+00> : vector<16x2048xf32>
    %13 = tpu.matmul %12, %11, %cst_9 {dimension_numbers = #tpu.dot_dimension_numbers<[1], [0], [0], [1], [0, 0, 1, 1], [], []>} : vector<16x18xf32>, vector<18x2048xf32>, vector<16x2048xf32> -> vector<16x2048xf32>
    %14 = vector.extract_strided_slice %13 {offsets = [0, 0], sizes = [8, 2048], strides = [1, 1]} : vector<16x2048xf32> to vector<8x2048xf32>
    %15 = math.tanh %14 : vector<8x2048xf32>
    %16 = vector.extract_strided_slice %13 {offsets = [8, 0], sizes = [8, 2048], strides = [1, 1]} : vector<16x2048xf32> to vector<8x2048xf32>
    %17 = arith.negf %16 : vector<8x2048xf32>
    %18 = math.exp %17 : vector<8x2048xf32>
    %cst_10 = arith.constant 1.000000e+00 : f32
    %19 = vector.broadcast %cst_10 : f32 to vector<8x2048xf32>
    %20 = arith.addf %19, %18 : vector<8x2048xf32>
    %21 = arith.divf %19, %20 : vector<8x2048xf32>
    %22 = arith.mulf %15, %21 : vector<8x2048xf32>
    %c0_11 = arith.constant 0 : index
    %c0_12 = arith.constant 0 : index
    %23 = vector.load %arg5[%c0_11, %c0_12] : memref<24x8xf32, #tpu.memory_space<vmem>>, vector<24x8xf32>
    %cst_13 = arith.constant dense<0.000000e+00> : vector<24x2048xf32>
    %24 = tpu.matmul %23, %22, %cst_13 {dimension_numbers = #tpu.dot_dimension_numbers<[1], [0], [0], [1], [0, 0, 1, 1], [], []>} : vector<24x8xf32>, vector<8x2048xf32>, vector<24x2048xf32> -> vector<24x2048xf32>
    %c0_14 = arith.constant 0 : index
    %c0_15 = arith.constant 0 : index
    %25 = vector.load %arg6[%c0_14, %c0_15] : memref<24x1xf32, #tpu.memory_space<vmem>>, vector<24x1xf32>
    %26 = vector.broadcast %25 : vector<24x1xf32> to vector<24x2048xf32>
    %27 = arith.addf %24, %26 : vector<24x2048xf32>
    %28 = vector.extract_strided_slice %27 {offsets = [0, 0], sizes = [8, 2048], strides = [1, 1]} : vector<24x2048xf32> to vector<8x2048xf32>
    %c0_16 = arith.constant 0 : index
    %c0_17 = arith.constant 0 : index
    %c0_18 = arith.constant 0 : index
    %29 = vector.load %arg7[%c0_16, %c0_17, %c0_18] : memref<1x8x2048xf32, #tpu.memory_space<vmem>>, vector<1x8x2048xf32>
    %30 = vector.shape_cast %29 : vector<1x8x2048xf32> to vector<8x2048xf32>
    %31 = vector.shape_cast %28 : vector<8x2048xf32> to vector<1x8x2048xf32>
    tpu.vector_store %arg7[%c0_16, %c0_17, %c0_18], %31 {strides = array<i32>} : memref<1x8x2048xf32, #tpu.memory_space<vmem>>, vector<1x8x2048xf32>,
    %32 = vector.extract_strided_slice %27 {offsets = [8, 0], sizes = [16, 2048], strides = [1, 1]} : vector<24x2048xf32> to vector<16x2048xf32>
    %c0_19 = arith.constant 0 : index
    %c0_20 = arith.constant 0 : index
    %c0_21 = arith.constant 0 : index
    %33 = vector.load %arg8[%c0_19, %c0_20, %c0_21] : memref<1x16x2048xf32, #tpu.memory_space<vmem>>, vector<1x16x2048xf32>
    %34 = vector.shape_cast %33 : vector<1x16x2048xf32> to vector<16x2048xf32>
    %35 = vector.shape_cast %32 : vector<16x2048xf32> to vector<1x16x2048xf32>
    tpu.vector_store %arg8[%c0_19, %c0_20, %c0_21], %35 {strides = array<i32>} : memref<1x16x2048xf32, #tpu.memory_space<vmem>>, vector<1x16x2048xf32>,
    return
  }
  func.func @transform_0(%arg0: i32, %arg1: i32) -> (i32, i32, i32) {
    %c0_i32 = arith.constant 0 : i32
    %c0_i32_0 = arith.constant 0 : i32
    return %arg0, %c0_i32, %arg1 : i32, i32, i32
  }
  func.func @transform_1(%arg0: i32, %arg1: i32) -> (i32, i32, i32) {
    %c0_i32 = arith.constant 0 : i32
    %c0_i32_0 = arith.constant 0 : i32
    return %arg0, %c0_i32, %arg1 : i32, i32, i32
  }
  func.func @transform_2(%arg0: i32, %arg1: i32) -> (i32, i32) {
    %c0_i32 = arith.constant 0 : i32
    %c0_i32_0 = arith.constant 0 : i32
    %c0_i32_1 = arith.constant 0 : i32
    return %c0_i32, %c0_i32_0 : i32, i32
  }
  func.func @transform_3(%arg0: i32, %arg1: i32) -> (i32, i32) {
    %c0_i32 = arith.constant 0 : i32
    %c0_i32_0 = arith.constant 0 : i32
    %c0_i32_1 = arith.constant 0 : i32
    return %c0_i32, %c0_i32_0 : i32, i32
  }
  func.func @transform_4(%arg0: i32, %arg1: i32) -> (i32, i32) {
    %c0_i32 = arith.constant 0 : i32
    %c0_i32_0 = arith.constant 0 : i32
    %c0_i32_1 = arith.constant 0 : i32
    return %c0_i32, %c0_i32_0 : i32, i32
  }
  func.func @transform_5(%arg0: i32, %arg1: i32) -> (i32, i32, i32) {
    %c0_i32 = arith.constant 0 : i32
    %c0_i32_0 = arith.constant 0 : i32
    return %arg0, %c0_i32, %arg1 : i32, i32, i32
  }
  func.func @transform_6(%arg0: i32, %arg1: i32) -> (i32, i32, i32) {
    %c0_i32 = arith.constant 0 : i32
    %c0_i32_0 = arith.constant 0 : i32
    return %arg0, %c0_i32, %arg1 : i32, i32, i32
  }
}

</mosaic_0001>

<llo_original>
// kernel: tpu_custom_call.1
$region0: #{tpu_custom_call.1}
  #allocation0 [shape = 'u32[]', space=smem, size = 0x4, offset = 0x4, fixed_abs, tag = 'smem constant byte address 0x4 - core index']
  #allocation1 [shape = 'u32[144,128]{1,0:T(1,128)}', space=vmem, size = 0x12000, scoped, tag = 'internal scratch']
  #allocation2 [shape = 'f32[4,128]{1,0:T(4,128)}', space=vmem, size = 0x800, scoped, tag = 'scratch operand']
  %s0 = inlined_call_operand.vmem [shape: f32[2,4,2048], index: 0, kind: input, shape index: {}]
  %s1 = inlined_call_operand.vmem [shape: f32[2,5,2048], index: 1, kind: input, shape index: {}]
  %s2 = inlined_call_operand.vmem [shape: f32[16,18], index: 2, kind: input, shape index: {}]
  %s3 = inlined_call_operand.vmem [shape: f32[24,8], index: 3, kind: input, shape index: {}]
  %s4 = inlined_call_operand.vmem [shape: f32[24,1], index: 4, kind: input, shape index: {}]
  %s5 = inlined_call_operand.hbm [shape: f32[2,8,2048], index: 5, kind: output, shape index: {0}]
  %s6 = inlined_call_operand.hbm [shape: f32[2,16,2048], index: 6, kind: output, shape index: {1}]
  %7 = xla_tuple %s5, %s6
  %s8 = sld [smem:[#allocation0]]
  $region61: #{tpu_custom_call.1} parent=0
    _
  %s10 = ssub.s32 1, %s8
  %s11 = scalar_select 0, %s10, %s8
  $region1: #{tpu_custom_call.1} parent=0
    #allocation3 [shape = 'u8[131072]{0}', space=vmem, size = 0x20000, scoped, tag = 'output window, operand 0']
    #allocation4 [shape = 's32[2]{0}', space=sflag, size = 0x8, scoped, tag = 'scoped memory for tpu_custom_call.1']
    #allocation5 [shape = 'u8[262144]{0}', space=vmem, size = 0x40000, scoped, tag = 'output window, operand 1']
    #allocation6 [shape = 's32[2]{0}', space=sflag, size = 0x8, scoped, tag = 'scoped memory for tpu_custom_call.1']
    %12 = vsyncpa [#allocation4], 0
    %s13 = scalar_lea.sflag [#allocation4], 1
    %14 = vsyncpa %s13, 0
    %15 = vsyncpa [#allocation6], 0
    %s16 = scalar_lea.sflag [#allocation6], 1
    %17 = vsyncpa %s16, 0
    loop: start=0, step=1, limit=4
    $region2: #{tpu_custom_call.1} parent=1 // loop_pre_header
      _
    $region3: #{tpu_custom_call.1} parent=1 // loop_header
      %s19 = sphi 0, %s23
      %p20 = scmp.ge.s32.totalorder %s19, 4
      %s26 = sphi 0, %s38
      %s27 = sphi 0, %s34
      %s28 = sphi 0, %s26
      %s29 = sphi 0, %s27
      %s30 = sphi 0, %s28
      %s31 = sphi 0, %s29
      %s43 = sphi 0, %s45
      %s46 = sphi 0, %s43
      %s47 = sphi 0, %s46
      %s63 = sphi 0, %s47
      %s71 = sphi 0, %s73
      %s74 = sphi 0, %s71
      %s75 = sphi 0, %s74
      %s91 = sphi 0, %s75
      %s95 = sphi 0, %s95
      %s97 = sphi 0, %s95
      %s98 = sphi 0, %s97
      %s112 = sphi 0, %s98
      %s116 = sphi 0, %s116
      %s118 = sphi 0, %s116
      %s119 = sphi 0, %s118
      %s133 = sphi 0, %s119
      %s137 = sphi 0, %s137
      %s139 = sphi 0, %s137
      %s140 = sphi 0, %s139
      %s154 = sphi 0, %s140
      %s162 = sphi 0, %s164
      %s165 = sphi 0, %s162
      %s166 = sphi 0, %s165
      %s182 = sphi 0, %s166
      %s190 = sphi 0, %s192
      %s193 = sphi 0, %s190
      %s194 = sphi 0, %s193
      %s210 = sphi 0, %s194
    $region4: #{tpu_custom_call.1} parent=1 // loop_header_branch
      %22 = sbr.rel (%p20) target = $region8
    $region5: #{tpu_custom_call.1} parent=1 // loop_body
      %s24 = ssub.s32 %s19, 1
      %s25 = ssub.s32 %s19, 2
      %s32 = sadd.s32 1, %s27
      %p33 = scmp.ge.s32.totalorder %s32, 1
      %s34 = scalar_select %p33, 0, %s32
      %s35 = sadd.s32 1, %s26
      %s36 = scalar_select %p33, %s35, %s26
      %p37 = scmp.ge.s32.totalorder %s36, 2
      %s38 = scalar_select %p37, 0, %s36
      %s39 = ssub.s32 %s26, %s38
      %s40 = ssub.s32 %s27, %s34
      %s41 = sor.u32 %s39, %s40
      %p42 = scmp.eq.s32.totalorder %s41, 0
      %s44 = sadd.s32 %s43, 1
      %s45 = scalar_select %p42, %s43, %s44
      %p48 = pneg %p42
      %p49 = scmp.eq.s32.totalorder %s19, 1
      %p50 = por %p48, %p49
      %p51 = scmp.ne.s32.totalorder %s43, %s46
      %p52 = scmp.eq.s32.totalorder %s19, 0
      %p53 = por %p51, %p52
      %p54 = scmp.ne.s32.totalorder %s43, %s46
      %p55 = scmp.eq.s32.totalorder %s24, 1
      %p56 = por %p54, %p55
      %p57 = scmp.ne.s32.totalorder %s46, %s47
      %p58 = scmp.eq.s32.totalorder %s24, 0
      %p59 = por %p57, %p58
      %p60 = scmp.ne.s32.totalorder %s46, %s47
      %p61 = scmp.eq.s32.totalorder %s25, 1
      %p62 = por %p60, %p61
      %p64 = scmp.ne.s32.totalorder %s47, %s63
      %p65 = scmp.eq.s32.totalorder %s25, 0
      %p66 = por %p64, %p65
      %s67 = ssub.s32 %s26, %s38
      %s68 = ssub.s32 %s27, %s34
      %s69 = sor.u32 %s67, %s68
      %p70 = scmp.eq.s32.totalorder %s69, 0
      %s72 = sadd.s32 %s71, 1
      %s73 = scalar_select %p70, %s71, %s72
      %p76 = pneg %p70
      %p77 = scmp.eq.s32.totalorder %s19, 1
      %p78 = por %p76, %p77
      %p79 = scmp.ne.s32.totalorder %s71, %s74
      %p80 = scmp.eq.s32.totalorder %s19, 0
      %p81 = por %p79, %p80
      %p82 = scmp.ne.s32.totalorder %s71, %s74
      %p83 = scmp.eq.s32.totalorder %s24, 1
      %p84 = por %p82, %p83
      %p85 = scmp.ne.s32.totalorder %s74, %s75
      %p86 = scmp.eq.s32.totalorder %s24, 0
      %p87 = por %p85, %p86
      %p88 = scmp.ne.s32.totalorder %s74, %s75
      %p89 = scmp.eq.s32.totalorder %s25, 1
      %p90 = por %p88, %p89
      %p92 = scmp.ne.s32.totalorder %s75, %s91
      %p93 = scmp.eq.s32.totalorder %s25, 0
      %p94 = por %p92, %p93
      %s96 = sadd.s32 %s95, 1
      %p99 = scmp.eq.s32.totalorder %s19, 1
      %p100 = scmp.ne.s32.totalorder %s95, %s97
      %p101 = scmp.eq.s32.totalorder %s19, 0
      %p102 = por %p100, %p101
      %p103 = scmp.ne.s32.totalorder %s95, %s97
      %p104 = scmp.eq.s32.totalorder %s24, 1
      %p105 = por %p103, %p104
      %p106 = scmp.ne.s32.totalorder %s97, %s98
      %p107 = scmp.eq.s32.totalorder %s24, 0
      %p108 = por %p106, %p107
      %p109 = scmp.ne.s32.totalorder %s97, %s98
      %p110 = scmp.eq.s32.totalorder %s25, 1
      %p111 = por %p109, %p110
      %p113 = scmp.ne.s32.totalorder %s98, %s112
      %p114 = scmp.eq.s32.totalorder %s25, 0
      %p115 = por %p113, %p114
      %s117 = sadd.s32 %s116, 1
      %p120 = scmp.eq.s32.totalorder %s19, 1
      %p121 = scmp.ne.s32.totalorder %s116, %s118
      %p122 = scmp.eq.s32.totalorder %s19, 0
      %p123 = por %p121, %p122
      %p124 = scmp.ne.s32.totalorder %s116, %s118
      %p125 = scmp.eq.s32.totalorder %s24, 1
      %p126 = por %p124, %p125
      %p127 = scmp.ne.s32.totalorder %s118, %s119
      %p128 = scmp.eq.s32.totalorder %s24, 0
      %p129 = por %p127, %p128
      %p130 = scmp.ne.s32.totalorder %s118, %s119
      %p131 = scmp.eq.s32.totalorder %s25, 1
      %p132 = por %p130, %p131
      %p134 = scmp.ne.s32.totalorder %s119, %s133
      %p135 = scmp.eq.s32.totalorder %s25, 0
      %p136 = por %p134, %p135
      %s138 = sadd.s32 %s137, 1
      %p141 = scmp.eq.s32.totalorder %s19, 1
      %p142 = scmp.ne.s32.totalorder %s137, %s139
      %p143 = scmp.eq.s32.totalorder %s19, 0
      %p144 = por %p142, %p143
      %p145 = scmp.ne.s32.totalorder %s137, %s139
      %p146 = scmp.eq.s32.totalorder %s24, 1
      %p147 = por %p145, %p146
      %p148 = scmp.ne.s32.totalorder %s139, %s140
      %p149 = scmp.eq.s32.totalorder %s24, 0
      %p150 = por %p148, %p149
      %p151 = scmp.ne.s32.totalorder %s139, %s140
      %p152 = scmp.eq.s32.totalorder %s25, 1
      %p153 = por %p151, %p152
      %p155 = scmp.ne.s32.totalorder %s140, %s154
      %p156 = scmp.eq.s32.totalorder %s25, 0
      %p157 = por %p155, %p156
      %s158 = ssub.s32 %s26, %s38
      %s159 = ssub.s32 %s27, %s34
      %s160 = sor.u32 %s158, %s159
      %p161 = scmp.eq.s32.totalorder %s160, 0
      %s163 = sadd.s32 %s162, 1
      %s164 = scalar_select %p161, %s162, %s163
      %p167 = pneg %p161
      %p168 = scmp.eq.s32.totalorder %s19, 1
      %p169 = por %p167, %p168
      %p170 = scmp.ne.s32.totalorder %s162, %s165
      %p171 = scmp.eq.s32.totalorder %s19, 0
      %p172 = por %p170, %p171
      %p173 = scmp.ne.s32.totalorder %s162, %s165
      %p174 = scmp.eq.s32.totalorder %s24, 1
      %p175 = por %p173, %p174
      %p176 = scmp.ne.s32.totalorder %s165, %s166
      %p177 = scmp.eq.s32.totalorder %s24, 0
      %p178 = por %p176, %p177
      %p179 = scmp.ne.s32.totalorder %s165, %s166
      %p180 = scmp.eq.s32.totalorder %s25, 1
      %p181 = por %p179, %p180
      %p183 = scmp.ne.s32.totalorder %s166, %s182
      %p184 = scmp.eq.s32.totalorder %s25, 0
      %p185 = por %p183, %p184
      %s186 = ssub.s32 %s26, %s38
      %s187 = ssub.s32 %s27, %s34
      %s188 = sor.u32 %s186, %s187
      %p189 = scmp.eq.s32.totalorder %s188, 0
      %s191 = sadd.s32 %s190, 1
      %s192 = scalar_select %p189, %s190, %s191
      %p195 = pneg %p189
      %p196 = scmp.eq.s32.totalorder %s19, 1
      %p197 = por %p195, %p196
      %p198 = scmp.ne.s32.totalorder %s190, %s193
      %p199 = scmp.eq.s32.totalorder %s19, 0
      %p200 = por %p198, %p199
      %p201 = scmp.ne.s32.totalorder %s190, %s193
      %p202 = scmp.eq.s32.totalorder %s24, 1
      %p203 = por %p201, %p202
      %p204 = scmp.ne.s32.totalorder %s193, %s194
      %p205 = scmp.eq.s32.totalorder %s24, 0
      %p206 = por %p204, %p205
      %p207 = scmp.ne.s32.totalorder %s193, %s194
      %p208 = scmp.eq.s32.totalorder %s25, 1
      %p209 = por %p207, %p208
      %p211 = scmp.ne.s32.totalorder %s194, %s210
      %p212 = scmp.eq.s32.totalorder %s25, 0
      %p213 = por %p211, %p212
      %p214 = scmp.le.s32.totalorder 1, %s19
      %p215 = scmp.lt.s32.totalorder %s19, 3
      %p216 = pnand %p214, %p215
      %p217 = pneg %p216
      // Predicated region
      $region9: #{tpu_custom_call.1} parent=5 // pred_check
        _
      $region10: #{tpu_custom_call.1} parent=5 // pred_check_branch
        %219 = sbr.rel (%p216) target = $region12
      $region11: #{tpu_custom_call.1} parent=5 // pred_region
        %s220 = ssub.s32 %s19, 1
        // Predicated region
        $region13: #{tpu_custom_call.1} parent=11 // pred_check
          %p221 = pneg %p108
        $region14: #{tpu_custom_call.1} parent=11 // pred_check_branch
          %223 = sbr.rel (%p221) target = $region16
        $region15: #{tpu_custom_call.1} parent=11 // pred_region
          _
        $region16: #{tpu_custom_call.1} parent=11 // pred_fallthru
          _
        // Predicated region
        $region17: #{tpu_custom_call.1} parent=11 // pred_check
          %p224 = pneg %p129
        $region18: #{tpu_custom_call.1} parent=11 // pred_check_branch
          %226 = sbr.rel (%p224) target = $region20
        $region19: #{tpu_custom_call.1} parent=11 // pred_region
          _
        $region20: #{tpu_custom_call.1} parent=11 // pred_fallthru
          _
        // Predicated region
        $region21: #{tpu_custom_call.1} parent=11 // pred_check
          %p227 = pneg %p150
        $region22: #{tpu_custom_call.1} parent=11 // pred_check_branch
          %229 = sbr.rel (%p227) target = $region24
        $region23: #{tpu_custom_call.1} parent=11 // pred_region
          _
        $region24: #{tpu_custom_call.1} parent=11 // pred_fallthru
          _
      $region12: #{tpu_custom_call.1} parent=5 // pred_fallthru
        _
      %p230 = scmp.lt.s32.totalorder %s19, 2
      // Predicated region
      $region25: #{tpu_custom_call.1} parent=5 // pred_check
        %p231 = pneg %p230
      $region26: #{tpu_custom_call.1} parent=5 // pred_check_branch
        %233 = sbr.rel (%p231) target = $region28
      $region27: #{tpu_custom_call.1} parent=5 // pred_region
        // Predicated region
        $region29: #{tpu_custom_call.1} parent=27 // pred_check
          %p234 = pneg %p53
        $region30: #{tpu_custom_call.1} parent=27 // pred_check_branch
          %236 = sbr.rel (%p234) target = $region32
        $region31: #{tpu_custom_call.1} parent=27 // pred_region
          %s237 = smul.u32 16, %s27
          %p238 = scmp.lt.s32.totalorder %s26, 1
          %s239 = scalar_select %p238, %s26, 1
          %p240 = scmp.lt.s32.totalorder %s237, 15
          %s241 = scalar_select %p240, %s237, 15
          %s242 = smul.addr %s239, 16
          %s243 = sadd.s32 %s241, %s242
          %s244 = smul.addr %s243, 4
          %s245 = scalar_lea.vmem %s0, %s244
          %s246 = smul.u32 16, %s27
        $region32: #{tpu_custom_call.1} parent=27 // pred_fallthru
          _
        // Predicated region
        $region33: #{tpu_custom_call.1} parent=27 // pred_check
          %p247 = pneg %p81
        $region34: #{tpu_custom_call.1} parent=27 // pred_check_branch
          %249 = sbr.rel (%p247) target = $region36
        $region35: #{tpu_custom_call.1} parent=27 // pred_region
          %s250 = smul.u32 16, %s27
          %p251 = scmp.lt.s32.totalorder %s26, 1
          %s252 = scalar_select %p251, %s26, 1
          %p253 = scmp.lt.s32.totalorder %s250, 15
          %s254 = scalar_select %p253, %s250, 15
          %s255 = smul.addr %s252, 16
          %s256 = sadd.s32 %s254, %s255
          %s257 = smul.addr %s256, 8
          %s258 = scalar_lea.vmem %s1, %s257
          %s259 = smul.u32 16, %s27
        $region36: #{tpu_custom_call.1} parent=27 // pred_fallthru
          _
      $region28: #{tpu_custom_call.1} parent=5 // pred_fallthru
        _
      %p260 = scmp.le.s32.totalorder 1, %s19
      %p261 = scmp.lt.s32.totalorder %s19, 3
      %p262 = pnand %p260, %p261
      %p263 = pneg %p262
      // Predicated region
      $region37: #{tpu_custom_call.1} parent=5 // pred_check
        _
      $region38: #{tpu_custom_call.1} parent=5 // pred_check_branch
        %265 = sbr.rel (%p262) target = $region40
      $region39: #{tpu_custom_call.1} parent=5 // pred_region
        %s266 = ssub.s32 %s19, 1
        %s267 = smul.u32 16, %s29
        %p268 = scmp.lt.s32.totalorder %s28, 1
        %s269 = scalar_select %p268, %s28, 1
        %p270 = scmp.lt.s32.totalorder %s267, 15
        %s271 = scalar_select %p270, %s267, 15
        %s272 = smul.addr %s269, 16
        %s273 = sadd.s32 %s271, %s272
        %s274 = smul.addr %s273, 4
        %s275 = scalar_lea.vmem %s0, %s274
        %p276 = pneg %p59
        %p277 = pneg %p56
        %s278 = smul.u32 16, %s29
        %p279 = scmp.lt.s32.totalorder %s28, 1
        %s280 = scalar_select %p279, %s28, 1
        %p281 = scmp.lt.s32.totalorder %s278, 15
        %s282 = scalar_select %p281, %s278, 15
        %s283 = smul.addr %s280, 16
        %s284 = sadd.s32 %s282, %s283
        %s285 = smul.addr %s284, 8
        %s286 = scalar_lea.vmem %s1, %s285
        %p287 = pneg %p87
        %p288 = pneg %p84
        %p289 = pneg %p108
        %p290 = pneg %p105
        %p291 = pneg %p129
        %p292 = pneg %p126
        %p293 = pneg %p150
        %p294 = pneg %p147
        %p295 = pneg %p178
        %p296 = pneg %p175
        %s297 = sand.u32 %s165, 1
        %s298 = scalar_lea.sflag [#allocation4], %s297
        %s299 = sand.u32 %s165, 1
        %s300 = smul.addr %s299, 128
        %s301 = scalar_lea.vmem [#allocation3], %s300
        %p302 = pneg %p206
        %p303 = pneg %p203
        %s304 = sand.u32 %s193, 1
        %s305 = scalar_lea.sflag [#allocation6], %s304
        %s306 = sand.u32 %s193, 1
        %s307 = smul.addr %s306, 256
        %s308 = scalar_lea.vmem [#allocation5], %s307
        %s309 = smul.u32 16, %s29
        %p310 = scmp.lt.s32.totalorder %s28, 1
        %s311 = scalar_select %p310, %s28, 1
        %p312 = scmp.lt.s32.totalorder %s309, 15
        %s313 = scalar_select %p312, %s309, 15
        %s314 = smul.addr %s311, 16
        %s315 = sadd.s32 %s313, %s314
        %s316 = smul.addr %s315, 4
        %s317 = scalar_lea.vmem %s0, %s316
        %s318 = smul.u32 16, %s29
        %s319 = smul.u32 16, %s29
        %p320 = scmp.lt.s32.totalorder %s28, 1
        %s321 = scalar_select %p320, %s28, 1
        %p322 = scmp.lt.s32.totalorder %s319, 15
        %s323 = scalar_select %p322, %s319, 15
        %s324 = smul.addr %s321, 16
        %s325 = sadd.s32 %s323, %s324
        %s326 = smul.addr %s325, 8
        %s327 = scalar_lea.vmem %s1, %s326
        %s328 = smul.u32 16, %s29
        %s329 = smul.u32 16, %s29
        %s330 = smul.u32 16, %s29
        %v331 = vld [vmem:[%s317] sm:$0xff]
        %v332 = vld [vmem:[%s317 + $0x8] sm:$0xff]
        %v333 = vld [vmem:[%s317 + $0x10] sm:$0xff]
        %v334 = vld [vmem:[%s317 + $0x18] sm:$0xff]
        %v335 = vld [vmem:[%s317 + $0x20] sm:$0xff]
        %v336 = vld [vmem:[%s317 + $0x28] sm:$0xff]
        %v337 = vld [vmem:[%s317 + $0x30] sm:$0xff]
        %v338 = vld [vmem:[%s317 + $0x38] sm:$0xff]
        %v339 = vld [vmem:[%s327] sm:$0x1f]
        %v340 = vld [vmem:[%s327 + $0x8] sm:$0x1f]
        %v341 = vld [vmem:[%s327 + $0x10] sm:$0x1f]
        %v342 = vld [vmem:[%s327 + $0x18] sm:$0x1f]
        %v343 = vld [vmem:[%s327 + $0x20] sm:$0x1f]
        %v344 = vld [vmem:[%s327 + $0x28] sm:$0x1f]
        %v345 = vld [vmem:[%s327 + $0x30] sm:$0x1f]
        %v346 = vld [vmem:[%s327 + $0x38] sm:$0x1f]
        %v347 = vld [vmem:[%s327 + $0x40] sm:$0x1f]
        %v348 = vld [vmem:[%s327 + $0x48] sm:$0x1f]
        %v349 = vld [vmem:[%s327 + $0x50] sm:$0x1f]
        %v350 = vld [vmem:[%s327 + $0x58] sm:$0x1f]
        %v351 = vld [vmem:[%s327 + $0x60] sm:$0x1f]
        %v352 = vld [vmem:[%s327 + $0x68] sm:$0x1f]
        %v353 = vld [vmem:[%s327 + $0x70] sm:$0x1f]
        %v354 = vld [vmem:[%s327 + $0x78] sm:$0x1f]
        %v363 = vcombine.high %v331, %v331
        %v364 = vcombine.high %v332, %v332
        %v365 = vcombine.high %v333, %v333
        %v366 = vcombine.high %v334, %v334
        %v367 = vcombine.high %v335, %v335
        %v368 = vcombine.high %v336, %v336
        %v369 = vcombine.high %v337, %v337
        %v370 = vcombine.high %v338, %v338
        %379 = vrot.lane.b32.xlu0 0.0, 2
        %v380 = vpop.permute.xlu0 %379
        %381 = vrot.lane.b32.xlu0 %v331, 2
        %v382 = vpop.permute.xlu0 %381
        %383 = vrot.lane.b32.xlu0 %v363, 2
        %v384 = vpop.permute.xlu0 %383
        %385 = vrot.lane.b32.xlu0 %v332, 2
        %v386 = vpop.permute.xlu0 %385
        %387 = vrot.lane.b32.xlu0 %v364, 2
        %v388 = vpop.permute.xlu0 %387
        %389 = vrot.lane.b32.xlu0 %v333, 2
        %v390 = vpop.permute.xlu0 %389
        %391 = vrot.lane.b32.xlu0 %v365, 2
        %v392 = vpop.permute.xlu0 %391
        %393 = vrot.lane.b32.xlu0 %v334, 2
        %v394 = vpop.permute.xlu0 %393
        %395 = vrot.lane.b32.xlu0 %v366, 2
        %v396 = vpop.permute.xlu0 %395
        %397 = vrot.lane.b32.xlu0 %v335, 2
        %v398 = vpop.permute.xlu0 %397
        %399 = vrot.lane.b32.xlu0 %v367, 2
        %v400 = vpop.permute.xlu0 %399
        %401 = vrot.lane.b32.xlu0 %v336, 2
        %v402 = vpop.permute.xlu0 %401
        %403 = vrot.lane.b32.xlu0 %v368, 2
        %v404 = vpop.permute.xlu0 %403
        %405 = vrot.lane.b32.xlu0 %v337, 2
        %v406 = vpop.permute.xlu0 %405
        %407 = vrot.lane.b32.xlu0 %v369, 2
        %v408 = vpop.permute.xlu0 %407
        %409 = vrot.lane.b32.xlu0 %v338, 2
        %v410 = vpop.permute.xlu0 %409
        %411 = vrot.lane.b32.xlu0 %v370, 2
        %v412 = vpop.permute.xlu0 %411
        %v413 = vlaneseq
        %v414 = vand.u32 %v413, 127
        %vm415 = vcmp.lt.s32.totalorder %v414, 2
        %v416 = vsel %vm415, %v410, %v412
        %v417 = vsel %vm415, %v408, %v410
        %v418 = vsel %vm415, %v406, %v408
        %v419 = vsel %vm415, %v404, %v406
        %v420 = vsel %vm415, %v402, %v404
        %v421 = vsel %vm415, %v400, %v402
        %v422 = vsel %vm415, %v398, %v400
        %v423 = vsel %vm415, %v396, %v398
        %v424 = vsel %vm415, %v394, %v396
        %v425 = vsel %vm415, %v392, %v394
        %v426 = vsel %vm415, %v390, %v392
        %v427 = vsel %vm415, %v388, %v390
        %v428 = vsel %vm415, %v386, %v388
        %v429 = vsel %vm415, %v384, %v386
        %v430 = vsel %vm415, %v382, %v384
        %v431 = vsel %vm415, %v380, %v382
        %v432 = vsel %vm415, %v412, %v380
        %433 = vrot.lane.b32.xlu0 %v432, 2
        %v434 = vpop.permute.xlu0 %433
        %435 = vrot.lane.b32.xlu0 %v431, 2
        %v436 = vpop.permute.xlu0 %435
        %437 = vrot.lane.b32.xlu0 %v430, 2
        %v438 = vpop.permute.xlu0 %437
        %439 = vrot.lane.b32.xlu0 %v429, 2
        %v440 = vpop.permute.xlu0 %439
        %441 = vrot.lane.b32.xlu0 %v428, 2
        %v442 = vpop.permute.xlu0 %441
        %443 = vrot.lane.b32.xlu0 %v427, 2
        %v444 = vpop.permute.xlu0 %443
        %445 = vrot.lane.b32.xlu0 %v426, 2
        %v446 = vpop.permute.xlu0 %445
        %447 = vrot.lane.b32.xlu0 %v425, 2
        %v448 = vpop.permute.xlu0 %447
        %449 = vrot.lane.b32.xlu0 %v424, 2
        %v450 = vpop.permute.xlu0 %449
        %451 = vrot.lane.b32.xlu0 %v423, 2
        %v452 = vpop.permute.xlu0 %451
        %453 = vrot.lane.b32.xlu0 %v422, 2
        %v454 = vpop.permute.xlu0 %453
        %455 = vrot.lane.b32.xlu0 %v421, 2
        %v456 = vpop.permute.xlu0 %455
        %457 = vrot.lane.b32.xlu0 %v420, 2
        %v458 = vpop.permute.xlu0 %457
        %459 = vrot.lane.b32.xlu0 %v419, 2
        %v460 = vpop.permute.xlu0 %459
        %461 = vrot.lane.b32.xlu0 %v418, 2
        %v462 = vpop.permute.xlu0 %461
        %463 = vrot.lane.b32.xlu0 %v417, 2
        %v464 = vpop.permute.xlu0 %463
        %465 = vrot.lane.b32.xlu0 %v416, 2
        %v466 = vpop.permute.xlu0 %465
        %v467 = vsel %vm415, %v464, %v466
        %v468 = vsel %vm415, %v462, %v464
        %v469 = vsel %vm415, %v460, %v462
        %v470 = vsel %vm415, %v458, %v460
        %v471 = vsel %vm415, %v456, %v458
        %v472 = vsel %vm415, %v454, %v456
        %v473 = vsel %vm415, %v452, %v454
        %v474 = vsel %vm415, %v450, %v452
        %v475 = vsel %vm415, %v448, %v450
        %v476 = vsel %vm415, %v446, %v448
        %v477 = vsel %vm415, %v444, %v446
        %v478 = vsel %vm415, %v442, %v444
        %v479 = vsel %vm415, %v440, %v442
        %v480 = vsel %vm415, %v438, %v440
        %v481 = vsel %vm415, %v436, %v438
        %v482 = vsel %vm415, %v434, %v436
        %v499 = vrot.slane %v431, 4
        %v500 = vrot.slane %v430, 4
        %v501 = vrot.slane %v429, 4
        %v502 = vrot.slane %v428, 4
        %v503 = vrot.slane %v427, 4
        %v504 = vrot.slane %v426, 4
        %v505 = vrot.slane %v425, 4
        %v506 = vrot.slane %v424, 4
        %v507 = vrot.slane %v423, 4
        %v508 = vrot.slane %v422, 4
        %v509 = vrot.slane %v421, 4
        %v510 = vrot.slane %v420, 4
        %v511 = vrot.slane %v419, 4
        %v512 = vrot.slane %v418, 4
        %v513 = vrot.slane %v417, 4
        %v514 = vrot.slane %v416, 4
        %v547 = vrot.slane %v339, 4
        %v548 = vrot.slane %v340, 4
        %v549 = vrot.slane %v341, 4
        %v550 = vrot.slane %v342, 4
        %v551 = vrot.slane %v343, 4
        %v552 = vrot.slane %v344, 4
        %v553 = vrot.slane %v345, 4
        %v554 = vrot.slane %v346, 4
        %v555 = vrot.slane %v347, 4
        %v556 = vrot.slane %v348, 4
        %v557 = vrot.slane %v349, 4
        %v558 = vrot.slane %v350, 4
        %v559 = vrot.slane %v351, 4
        %v560 = vrot.slane %v352, 4
        %v561 = vrot.slane %v353, 4
        %v562 = vrot.slane %v354, 4
        %vm579 = vcmask 1043456
        %v580 = vsel %vm579, %v482, %v499
        %v581 = vsel %vm579, %v481, %v500
        %v582 = vsel %vm579, %v480, %v501
        %v583 = vsel %vm579, %v479, %v502
        %v584 = vsel %vm579, %v478, %v503
        %v585 = vsel %vm579, %v477, %v504
        %v586 = vsel %vm579, %v476, %v505
        %v587 = vsel %vm579, %v475, %v506
        %v588 = vsel %vm579, %v474, %v507
        %v589 = vsel %vm579, %v473, %v508
        %v590 = vsel %vm579, %v472, %v509
        %v591 = vsel %vm579, %v471, %v510
        %v592 = vsel %vm579, %v470, %v511
        %v593 = vsel %vm579, %v469, %v512
        %v594 = vsel %vm579, %v468, %v513
        %v595 = vsel %vm579, %v467, %v514
        %v596 = vsel %vm579, %v331, %v547
        %v597 = vsel %vm579, %v363, %v548
        %v598 = vsel %vm579, %v332, %v549
        %v599 = vsel %vm579, %v364, %v550
        %v600 = vsel %vm579, %v333, %v551
        %v601 = vsel %vm579, %v365, %v552
        %v602 = vsel %vm579, %v334, %v553
        %v603 = vsel %vm579, %v366, %v554
        %v604 = vsel %vm579, %v335, %v555
        %v605 = vsel %vm579, %v367, %v556
        %v606 = vsel %vm579, %v336, %v557
        %v607 = vsel %vm579, %v368, %v558
        %v608 = vsel %vm579, %v337, %v559
        %v609 = vsel %vm579, %v369, %v560
        %v610 = vsel %vm579, %v338, %v561
        %v611 = vsel %vm579, %v370, %v562
        %vm612 = vcmask 1040384
        %v613 = vsel %vm612, %v547, 1.0
        %v614 = vsel %vm612, %v548, 1.0
        %v615 = vsel %vm612, %v549, 1.0
        %v616 = vsel %vm612, %v550, 1.0
        %v617 = vsel %vm612, %v551, 1.0
        %v618 = vsel %vm612, %v552, 1.0
        %v619 = vsel %vm612, %v553, 1.0
        %v620 = vsel %vm612, %v554, 1.0
        %v621 = vsel %vm612, %v555, 1.0
        %v622 = vsel %vm612, %v556, 1.0
        %v623 = vsel %vm612, %v557, 1.0
        %v624 = vsel %vm612, %v558, 1.0
        %v625 = vsel %vm612, %v559, 1.0
        %v626 = vsel %vm612, %v560, 1.0
        %v627 = vsel %vm612, %v561, 1.0
        %v628 = vsel %vm612, %v562, 1.0
        %v629 = vld [vmem:[%s2] sm:$0xff]
        %v630 = vld [vmem:[%s2 + $0x8] sm:$0xff]
        %vm631 = vcmask 146432
        %v633 = vsel %vm631, %v629, 0
        %v636 = vsel %vm631, %v630, 0
        %vm638 = vcmask 1041408
        %v640 = vsel %vm638, %v613, 0
        %v643 = vsel %vm638, %v614, 0
        %v646 = vsel %vm638, %v615, 0
        %v649 = vsel %vm638, %v616, 0
        %v652 = vsel %vm638, %v617, 0
        %v655 = vsel %vm638, %v618, 0
        %v658 = vsel %vm638, %v619, 0
        %v661 = vsel %vm638, %v620, 0
        %v664 = vsel %vm638, %v621, 0
        %v667 = vsel %vm638, %v622, 0
        %v670 = vsel %vm638, %v623, 0
        %v673 = vsel %vm638, %v624, 0
        %v676 = vsel %vm638, %v625, 0
        %v679 = vsel %vm638, %v626, 0
        %v682 = vsel %vm638, %v627, 0
        %v685 = vsel %vm638, %v628, 0
        %687 = vmatprep.subr.mxu0 0.0
        %688 = vmatpush1.msra.mxu0 0.0
        %689 = vmatprep.subr.mxu0 0.0
        %690 = vmatpush1.msra.mxu0 0.0
        %691 = vmatprep.subr.mxu0 0.0
        %692 = vmatpush1.msra.mxu0 0.0
        %693 = vmatprep.subr.mxu0 0.0
        %694 = vmatpush1.msra.mxu0 0.0
        %695 = vmatprep.subr.mxu0 0.0
        %696 = vmatpush1.msra.mxu0 0.0
        %697 = vmatprep.subr.mxu0 0.0
        %698 = vmatpush1.msra.mxu0 0.0
        %699 = vmatprep.subr.mxu0 0.0
        %700 = vmatpush1.msra.mxu0 0.0
        %701 = vmatprep.subr.mxu0 0.0
        %702 = vmatpush1.msra.mxu0 0.0
        %703 = vmatprep.subr.mxu0 0.0
        %704 = vmatpush1.msra.mxu0 0.0
        %705 = vmatprep.subr.mxu0 0.0
        %706 = vmatpush1.msra.mxu0 0.0
        %707 = vmatprep.subr.mxu0 0.0
        %708 = vmatpush1.msra.mxu0 0.0
        %709 = vmatprep.subr.mxu0 0.0
        %710 = vmatpush1.msra.mxu0 0.0
        %711 = vmatprep.subr.mxu0 0.0
        %712 = vmatpush1.msra.mxu0 0.0
        %713 = vmatprep.subr.mxu0 %v643
        %714 = vmatpush1.msra.mxu0 %v640
        %715 = vmatprep.subr.mxu0 %v597
        %716 = vmatpush1.msra.mxu0 %v596
        %717 = vmatprep.subr.mxu0 %v581
        %718 = vmatpush1.msra.mxu0 %v580
        %719 = vmatprep.subr.mxu0 0.0
        %720 = vmatpush2.msra.mxu0 0.0
        %721 = vmatprep.subr.mxu0 0.0
        %722 = vmatpush2.msra.mxu0 0.0
        %723 = vmatprep.subr.mxu0 0.0
        %724 = vmatpush2.msra.mxu0 0.0
        %725 = vmatprep.subr.mxu0 0.0
        %726 = vmatpush2.msra.mxu0 0.0
        %727 = vmatprep.subr.mxu0 0.0
        %728 = vmatpush2.msra.mxu0 0.0
        %729 = vmatprep.subr.mxu0 0.0
        %730 = vmatpush2.msra.mxu0 0.0
        %731 = vmatprep.subr.mxu0 0.0
        %732 = vmatpush2.msra.mxu0 0.0
        %733 = vmatprep.subr.mxu0 0.0
        %734 = vmatpush2.msra.mxu0 0.0
        %735 = vmatprep.subr.mxu0 0.0
        %736 = vmatpush2.msra.mxu0 0.0
        %737 = vmatprep.subr.mxu0 0.0
        %738 = vmatpush2.msra.mxu0 0.0
        %739 = vmatprep.subr.mxu0 0.0
        %740 = vmatpush2.msra.mxu0 0.0
        %741 = vmatprep.subr.mxu0 0.0
        %742 = vmatpush2.msra.mxu0 0.0
        %743 = vmatprep.subr.mxu0 0.0
        %744 = vmatpush2.msra.mxu0 0.0
        %745 = vmatprep.subr.mxu0 0.0
        %746 = vmatpush2.msra.mxu0 0.0
        %747 = vmatprep.subr.mxu0 0.0
        %748 = vmatpush2.msra.mxu0 0.0
        %749 = vmatprep.subr.mxu0 0.0
        %750 = vmatpush2.msra.mxu0 0.0
        %751 = vmatprep.mubr.f32.mxu0 0.0
        %752 = vmatmul.mubr.f32.gmra.mxu0 %v633
        %v753 = vpop.f32.mrf.mxu0
        %v754 = vadd.f32 0.0, %v753
        %v755 = vpop.f32.mrf.mxu0
        %v756 = vadd.f32 0.0, %v755
        %757 = vmatprep.mubr.f32.mxu0 0.0
        %758 = vmatmul.mubr.f32.gmra.mxu0 %v636
        %v759 = vpop.f32.mrf.mxu0
        %v760 = vadd.f32 0.0, %v759
        %v761 = vpop.f32.mrf.mxu0
        %v762 = vadd.f32 0.0, %v761
        %763 = vdwg.mxu0
        %764 = vmatprep.subr.mxu0 0.0
        %765 = vmatpush1.msra.mxu0 0.0
        %766 = vmatprep.subr.mxu0 0.0
        %767 = vmatpush1.msra.mxu0 0.0
        %768 = vmatprep.subr.mxu0 0.0
        %769 = vmatpush1.msra.mxu0 0.0
        %770 = vmatprep.subr.mxu0 0.0
        %771 = vmatpush1.msra.mxu0 0.0
        %772 = vmatprep.subr.mxu0 0.0
        %773 = vmatpush1.msra.mxu0 0.0
        %774 = vmatprep.subr.mxu0 0.0
        %775 = vmatpush1.msra.mxu0 0.0
        %776 = vmatprep.subr.mxu0 0.0
        %777 = vmatpush1.msra.mxu0 0.0
        %778 = vmatprep.subr.mxu0 0.0
        %779 = vmatpush1.msra.mxu0 0.0
        %780 = vmatprep.subr.mxu0 0.0
        %781 = vmatpush1.msra.mxu0 0.0
        %782 = vmatprep.subr.mxu0 0.0
        %783 = vmatpush1.msra.mxu0 0.0
        %784 = vmatprep.subr.mxu0 0.0
        %785 = vmatpush1.msra.mxu0 0.0
        %786 = vmatprep.subr.mxu0 0.0
        %787 = vmatpush1.msra.mxu0 0.0
        %788 = vmatprep.subr.mxu0 0.0
        %789 = vmatpush1.msra.mxu0 0.0
        %790 = vmatprep.subr.mxu0 %v649
        %791 = vmatpush1.msra.mxu0 %v646
        %792 = vmatprep.subr.mxu0 %v599
        %793 = vmatpush1.msra.mxu0 %v598
        %794 = vmatprep.subr.mxu0 %v583
        %795 = vmatpush1.msra.mxu0 %v582
        %796 = vmatprep.subr.mxu0 0.0
        %797 = vmatpush2.msra.mxu0 0.0
        %798 = vmatprep.subr.mxu0 0.0
        %799 = vmatpush2.msra.mxu0 0.0
        %800 = vmatprep.subr.mxu0 0.0
        %801 = vmatpush2.msra.mxu0 0.0
        %802 = vmatprep.subr.mxu0 0.0
        %803 = vmatpush2.msra.mxu0 0.0
        %804 = vmatprep.subr.mxu0 0.0
        %805 = vmatpush2.msra.mxu0 0.0
        %806 = vmatprep.subr.mxu0 0.0
        %807 = vmatpush2.msra.mxu0 0.0
        %808 = vmatprep.subr.mxu0 0.0
        %809 = vmatpush2.msra.mxu0 0.0
        %810 = vmatprep.subr.mxu0 0.0
        %811 = vmatpush2.msra.mxu0 0.0
        %812 = vmatprep.subr.mxu0 0.0
        %813 = vmatpush2.msra.mxu0 0.0
        %814 = vmatprep.subr.mxu0 0.0
        %815 = vmatpush2.msra.mxu0 0.0
        %816 = vmatprep.subr.mxu0 0.0
        %817 = vmatpush2.msra.mxu0 0.0
        %818 = vmatprep.subr.mxu0 0.0
        %819 = vmatpush2.msra.mxu0 0.0
        %820 = vmatprep.subr.mxu0 0.0
        %821 = vmatpush2.msra.mxu0 0.0
        %822 = vmatprep.subr.mxu0 0.0
        %823 = vmatpush2.msra.mxu0 0.0
        %824 = vmatprep.subr.mxu0 0.0
        %825 = vmatpush2.msra.mxu0 0.0
        %826 = vmatprep.subr.mxu0 0.0
        %827 = vmatpush2.msra.mxu0 0.0
        %828 = vmatprep.mubr.f32.mxu0 0.0
        %829 = vmatmul.mubr.f32.gmra.mxu0 %v633
        %v830 = vpop.f32.mrf.mxu0
        %v831 = vadd.f32 0.0, %v830
        %v832 = vpop.f32.mrf.mxu0
        %v833 = vadd.f32 0.0, %v832
        %834 = vmatprep.mubr.f32.mxu0 0.0
        %835 = vmatmul.mubr.f32.gmra.mxu0 %v636
        %v836 = vpop.f32.mrf.mxu0
        %v837 = vadd.f32 0.0, %v836
        %v838 = vpop.f32.mrf.mxu0
        %v839 = vadd.f32 0.0, %v838
        %840 = vdwg.mxu0
        %841 = vmatprep.subr.mxu0 0.0
        %842 = vmatpush1.msra.mxu0 0.0
        %843 = vmatprep.subr.mxu0 0.0
        %844 = vmatpush1.msra.mxu0 0.0
        %845 = vmatprep.subr.mxu0 0.0
        %846 = vmatpush1.msra.mxu0 0.0
        %847 = vmatprep.subr.mxu0 0.0
        %848 = vmatpush1.msra.mxu0 0.0
        %849 = vmatprep.subr.mxu0 0.0
        %850 = vmatpush1.msra.mxu0 0.0
        %851 = vmatprep.subr.mxu0 0.0
        %852 = vmatpush1.msra.mxu0 0.0
        %853 = vmatprep.subr.mxu0 0.0
        %854 = vmatpush1.msra.mxu0 0.0
        %855 = vmatprep.subr.mxu0 0.0
        %856 = vmatpush1.msra.mxu0 0.0
        %857 = vmatprep.subr.mxu0 0.0
        %858 = vmatpush1.msra.mxu0 0.0
        %859 = vmatprep.subr.mxu0 0.0
        %860 = vmatpush1.msra.mxu0 0.0
        %861 = vmatprep.subr.mxu0 0.0
        %862 = vmatpush1.msra.mxu0 0.0
        %863 = vmatprep.subr.mxu0 0.0
        %864 = vmatpush1.msra.mxu0 0.0
        %865 = vmatprep.subr.mxu0 0.0
        %866 = vmatpush1.msra.mxu0 0.0
        %867 = vmatprep.subr.mxu0 %v655
        %868 = vmatpush1.msra.mxu0 %v652
        %869 = vmatprep.subr.mxu0 %v601
        %870 = vmatpush1.msra.mxu0 %v600
        %871 = vmatprep.subr.mxu0 %v585
        %872 = vmatpush1.msra.mxu0 %v584
        %873 = vmatprep.subr.mxu0 0.0
        %874 = vmatpush2.msra.mxu0 0.0
        %875 = vmatprep.subr.mxu0 0.0
        %876 = vmatpush2.msra.mxu0 0.0
        %877 = vmatprep.subr.mxu0 0.0
        %878 = vmatpush2.msra.mxu0 0.0
        %879 = vmatprep.subr.mxu0 0.0
        %880 = vmatpush2.msra.mxu0 0.0
        %881 = vmatprep.subr.mxu0 0.0
        %882 = vmatpush2.msra.mxu0 0.0
        %883 = vmatprep.subr.mxu0 0.0
        %884 = vmatpush2.msra.mxu0 0.0
        %885 = vmatprep.subr.mxu0 0.0
        %886 = vmatpush2.msra.mxu0 0.0
        %887 = vmatprep.subr.mxu0 0.0
        %888 = vmatpush2.msra.mxu0 0.0
        %889 = vmatprep.subr.mxu0 0.0
        %890 = vmatpush2.msra.mxu0 0.0
        %891 = vmatprep.subr.mxu0 0.0
        %892 = vmatpush2.msra.mxu0 0.0
        %893 = vmatprep.subr.mxu0 0.0
        %894 = vmatpush2.msra.mxu0 0.0
        %895 = vmatprep.subr.mxu0 0.0
        %896 = vmatpush2.msra.mxu0 0.0
        %897 = vmatprep.subr.mxu0 0.0
        %898 = vmatpush2.msra.mxu0 0.0
        %899 = vmatprep.subr.mxu0 0.0
        %900 = vmatpush2.msra.mxu0 0.0
        %901 = vmatprep.subr.mxu0 0.0
        %902 = vmatpush2.msra.mxu0 0.0
        %903 = vmatprep.subr.mxu0 0.0
        %904 = vmatpush2.msra.mxu0 0.0
        %905 = vmatprep.mubr.f32.mxu0 0.0
        %906 = vmatmul.mubr.f32.gmra.mxu0 %v633
        %v907 = vpop.f32.mrf.mxu0
        %v908 = vadd.f32 0.0, %v907
        %v909 = vpop.f32.mrf.mxu0
        %v910 = vadd.f32 0.0, %v909
        %911 = vmatprep.mubr.f32.mxu0 0.0
        %912 = vmatmul.mubr.f32.gmra.mxu0 %v636
        %v913 = vpop.f32.mrf.mxu0
        %v914 = vadd.f32 0.0, %v913
        %v915 = vpop.f32.mrf.mxu0
        %v916 = vadd.f32 0.0, %v915
        %917 = vdwg.mxu0
        %918 = vmatprep.subr.mxu0 0.0
        %919 = vmatpush1.msra.mxu0 0.0
        %920 = vmatprep.subr.mxu0 0.0
        %921 = vmatpush1.msra.mxu0 0.0
        %922 = vmatprep.subr.mxu0 0.0
        %923 = vmatpush1.msra.mxu0 0.0
        %924 = vmatprep.subr.mxu0 0.0
        %925 = vmatpush1.msra.mxu0 0.0
        %926 = vmatprep.subr.mxu0 0.0
        %927 = vmatpush1.msra.mxu0 0.0
        %928 = vmatprep.subr.mxu0 0.0
        %929 = vmatpush1.msra.mxu0 0.0
        %930 = vmatprep.subr.mxu0 0.0
        %931 = vmatpush1.msra.mxu0 0.0
        %932 = vmatprep.subr.mxu0 0.0
        %933 = vmatpush1.msra.mxu0 0.0
        %934 = vmatprep.subr.mxu0 0.0
        %935 = vmatpush1.msra.mxu0 0.0
        %936 = vmatprep.subr.mxu0 0.0
        %937 = vmatpush1.msra.mxu0 0.0
        %938 = vmatprep.subr.mxu0 0.0
        %939 = vmatpush1.msra.mxu0 0.0
        %940 = vmatprep.subr.mxu0 0.0
        %941 = vmatpush1.msra.mxu0 0.0
        %942 = vmatprep.subr.mxu0 0.0
        %943 = vmatpush1.msra.mxu0 0.0
        %944 = vmatprep.subr.mxu0 %v661
        %945 = vmatpush1.msra.mxu0 %v658
        %946 = vmatprep.subr.mxu0 %v603
        %947 = vmatpush1.msra.mxu0 %v602
        %948 = vmatprep.subr.mxu0 %v587
        %949 = vmatpush1.msra.mxu0 %v586
        %950 = vmatprep.subr.mxu0 0.0
        %951 = vmatpush2.msra.mxu0 0.0
        %952 = vmatprep.subr.mxu0 0.0
        %953 = vmatpush2.msra.mxu0 0.0
        %954 = vmatprep.subr.mxu0 0.0
        %955 = vmatpush2.msra.mxu0 0.0
        %956 = vmatprep.subr.mxu0 0.0
        %957 = vmatpush2.msra.mxu0 0.0
        %958 = vmatprep.subr.mxu0 0.0
        %959 = vmatpush2.msra.mxu0 0.0
        %960 = vmatprep.subr.mxu0 0.0
        %961 = vmatpush2.msra.mxu0 0.0
        %962 = vmatprep.subr.mxu0 0.0
        %963 = vmatpush2.msra.mxu0 0.0
        %964 = vmatprep.subr.mxu0 0.0
        %965 = vmatpush2.msra.mxu0 0.0
        %966 = vmatprep.subr.mxu0 0.0
        %967 = vmatpush2.msra.mxu0 0.0
        %968 = vmatprep.subr.mxu0 0.0
        %969 = vmatpush2.msra.mxu0 0.0
        %970 = vmatprep.subr.mxu0 0.0
        %971 = vmatpush2.msra.mxu0 0.0
        %972 = vmatprep.subr.mxu0 0.0
        %973 = vmatpush2.msra.mxu0 0.0
        %974 = vmatprep.subr.mxu0 0.0
        %975 = vmatpush2.msra.mxu0 0.0
        %976 = vmatprep.subr.mxu0 0.0
        %977 = vmatpush2.msra.mxu0 0.0
        %978 = vmatprep.subr.mxu0 0.0
        %979 = vmatpush2.msra.mxu0 0.0
        %980 = vmatprep.subr.mxu0 0.0
        %981 = vmatpush2.msra.mxu0 0.0
        %982 = vmatprep.mubr.f32.mxu0 0.0
        %983 = vmatmul.mubr.f32.gmra.mxu0 %v633
        %v984 = vpop.f32.mrf.mxu0
        %v985 = vadd.f32 0.0, %v984
        %v986 = vpop.f32.mrf.mxu0
        %v987 = vadd.f32 0.0, %v986
        %988 = vmatprep.mubr.f32.mxu0 0.0
        %989 = vmatmul.mubr.f32.gmra.mxu0 %v636
        %v990 = vpop.f32.mrf.mxu0
        %v991 = vadd.f32 0.0, %v990
        %v992 = vpop.f32.mrf.mxu0
        %v993 = vadd.f32 0.0, %v992
        %994 = vdwg.mxu0
        %995 = vmatprep.subr.mxu0 0.0
        %996 = vmatpush1.msra.mxu0 0.0
        %997 = vmatprep.subr.mxu0 0.0
        %998 = vmatpush1.msra.mxu0 0.0
        %999 = vmatprep.subr.mxu0 0.0
        %1000 = vmatpush1.msra.mxu0 0.0
        %1001 = vmatprep.subr.mxu0 0.0
        %1002 = vmatpush1.msra.mxu0 0.0
        %1003 = vmatprep.subr.mxu0 0.0
        %1004 = vmatpush1.msra.mxu0 0.0
        %1005 = vmatprep.subr.mxu0 0.0
        %1006 = vmatpush1.msra.mxu0 0.0
        %1007 = vmatprep.subr.mxu0 0.0
        %1008 = vmatpush1.msra.mxu0 0.0
        %1009 = vmatprep.subr.mxu0 0.0
        %1010 = vmatpush1.msra.mxu0 0.0
        %1011 = vmatprep.subr.mxu0 0.0
        %1012 = vmatpush1.msra.mxu0 0.0
        %1013 = vmatprep.subr.mxu0 0.0
        %1014 = vmatpush1.msra.mxu0 0.0
        %1015 = vmatprep.subr.mxu0 0.0
        %1016 = vmatpush1.msra.mxu0 0.0
        %1017 = vmatprep.subr.mxu0 0.0
        %1018 = vmatpush1.msra.mxu0 0.0
        %1019 = vmatprep.subr.mxu0 0.0
        %1020 = vmatpush1.msra.mxu0 0.0
        %1021 = vmatprep.subr.mxu0 %v667
        %1022 = vmatpush1.msra.mxu0 %v664
        %1023 = vmatprep.subr.mxu0 %v605
        %1024 = vmatpush1.msra.mxu0 %v604
        %1025 = vmatprep.subr.mxu0 %v589
        %1026 = vmatpush1.msra.mxu0 %v588
        %1027 = vmatprep.subr.mxu0 0.0
        %1028 = vmatpush2.msra.mxu0 0.0
        %1029 = vmatprep.subr.mxu0 0.0
        %1030 = vmatpush2.msra.mxu0 0.0
        %1031 = vmatprep.subr.mxu0 0.0
        %1032 = vmatpush2.msra.mxu0 0.0
        %1033 = vmatprep.subr.mxu0 0.0
        %1034 = vmatpush2.msra.mxu0 0.0
        %1035 = vmatprep.subr.mxu0 0.0
        %1036 = vmatpush2.msra.mxu0 0.0
        %1037 = vmatprep.subr.mxu0 0.0
        %1038 = vmatpush2.msra.mxu0 0.0
        %1039 = vmatprep.subr.mxu0 0.0
        %1040 = vmatpush2.msra.mxu0 0.0
        %1041 = vmatprep.subr.mxu0 0.0
        %1042 = vmatpush2.msra.mxu0 0.0
        %1043 = vmatprep.subr.mxu0 0.0
        %1044 = vmatpush2.msra.mxu0 0.0
        %1045 = vmatprep.subr.mxu0 0.0
        %1046 = vmatpush2.msra.mxu0 0.0
        %1047 = vmatprep.subr.mxu0 0.0
        %1048 = vmatpush2.msra.mxu0 0.0
        %1049 = vmatprep.subr.mxu0 0.0
        %1050 = vmatpush2.msra.mxu0 0.0
        %1051 = vmatprep.subr.mxu0 0.0
        %1052 = vmatpush2.msra.mxu0 0.0
        %1053 = vmatprep.subr.mxu0 0.0
        %1054 = vmatpush2.msra.mxu0 0.0
        %1055 = vmatprep.subr.mxu0 0.0
        %1056 = vmatpush2.msra.mxu0 0.0
        %1057 = vmatprep.subr.mxu0 0.0
        %1058 = vmatpush2.msra.mxu0 0.0
        %1059 = vmatprep.mubr.f32.mxu0 0.0
        %1060 = vmatmul.mubr.f32.gmra.mxu0 %v633
        %v1061 = vpop.f32.mrf.mxu0
        %v1062 = vadd.f32 0.0, %v1061
        %v1063 = vpop.f32.mrf.mxu0
        %v1064 = vadd.f32 0.0, %v1063
        %1065 = vmatprep.mubr.f32.mxu0 0.0
        %1066 = vmatmul.mubr.f32.gmra.mxu0 %v636
        %v1067 = vpop.f32.mrf.mxu0
        %v1068 = vadd.f32 0.0, %v1067
        %v1069 = vpop.f32.mrf.mxu0
        %v1070 = vadd.f32 0.0, %v1069
        %1071 = vdwg.mxu0
        %1072 = vmatprep.subr.mxu0 0.0
        %1073 = vmatpush1.msra.mxu0 0.0
        %1074 = vmatprep.subr.mxu0 0.0
        %1075 = vmatpush1.msra.mxu0 0.0
        %1076 = vmatprep.subr.mxu0 0.0
        %1077 = vmatpush1.msra.mxu0 0.0
        %1078 = vmatprep.subr.mxu0 0.0
        %1079 = vmatpush1.msra.mxu0 0.0
        %1080 = vmatprep.subr.mxu0 0.0
        %1081 = vmatpush1.msra.mxu0 0.0
        %1082 = vmatprep.subr.mxu0 0.0
        %1083 = vmatpush1.msra.mxu0 0.0
        %1084 = vmatprep.subr.mxu0 0.0
        %1085 = vmatpush1.msra.mxu0 0.0
        %1086 = vmatprep.subr.mxu0 0.0
        %1087 = vmatpush1.msra.mxu0 0.0
        %1088 = vmatprep.subr.mxu0 0.0
        %1089 = vmatpush1.msra.mxu0 0.0
        %1090 = vmatprep.subr.mxu0 0.0
        %1091 = vmatpush1.msra.mxu0 0.0
        %1092 = vmatprep.subr.mxu0 0.0
        %1093 = vmatpush1.msra.mxu0 0.0
        %1094 = vmatprep.subr.mxu0 0.0
        %1095 = vmatpush1.msra.mxu0 0.0
        %1096 = vmatprep.subr.mxu0 0.0
        %1097 = vmatpush1.msra.mxu0 0.0
        %1098 = vmatprep.subr.mxu0 %v673
        %1099 = vmatpush1.msra.mxu0 %v670
        %1100 = vmatprep.subr.mxu0 %v607
        %1101 = vmatpush1.msra.mxu0 %v606
        %1102 = vmatprep.subr.mxu0 %v591
        %1103 = vmatpush1.msra.mxu0 %v590
        %1104 = vmatprep.subr.mxu0 0.0
        %1105 = vmatpush2.msra.mxu0 0.0
        %1106 = vmatprep.subr.mxu0 0.0
        %1107 = vmatpush2.msra.mxu0 0.0
        %1108 = vmatprep.subr.mxu0 0.0
        %1109 = vmatpush2.msra.mxu0 0.0
        %1110 = vmatprep.subr.mxu0 0.0
        %1111 = vmatpush2.msra.mxu0 0.0
        %1112 = vmatprep.subr.mxu0 0.0
        %1113 = vmatpush2.msra.mxu0 0.0
        %1114 = vmatprep.subr.mxu0 0.0
        %1115 = vmatpush2.msra.mxu0 0.0
        %1116 = vmatprep.subr.mxu0 0.0
        %1117 = vmatpush2.msra.mxu0 0.0
        %1118 = vmatprep.subr.mxu0 0.0
        %1119 = vmatpush2.msra.mxu0 0.0
        %1120 = vmatprep.subr.mxu0 0.0
        %1121 = vmatpush2.msra.mxu0 0.0
        %1122 = vmatprep.subr.mxu0 0.0
        %1123 = vmatpush2.msra.mxu0 0.0
        %1124 = vmatprep.subr.mxu0 0.0
        %1125 = vmatpush2.msra.mxu0 0.0
        %1126 = vmatprep.subr.mxu0 0.0
        %1127 = vmatpush2.msra.mxu0 0.0
        %1128 = vmatprep.subr.mxu0 0.0
        %1129 = vmatpush2.msra.mxu0 0.0
        %1130 = vmatprep.subr.mxu0 0.0
        %1131 = vmatpush2.msra.mxu0 0.0
        %1132 = vmatprep.subr.mxu0 0.0
        %1133 = vmatpush2.msra.mxu0 0.0
        %1134 = vmatprep.subr.mxu0 0.0
        %1135 = vmatpush2.msra.mxu0 0.0
        %1136 = vmatprep.mubr.f32.mxu0 0.0
        %1137 = vmatmul.mubr.f32.gmra.mxu0 %v633
        %v1138 = vpop.f32.mrf.mxu0
        %v1139 = vadd.f32 0.0, %v1138
        %v1140 = vpop.f32.mrf.mxu0
        %v1141 = vadd.f32 0.0, %v1140
        %1142 = vmatprep.mubr.f32.mxu0 0.0
        %1143 = vmatmul.mubr.f32.gmra.mxu0 %v636
        %v1144 = vpop.f32.mrf.mxu0
        %v1145 = vadd.f32 0.0, %v1144
        %v1146 = vpop.f32.mrf.mxu0
        %v1147 = vadd.f32 0.0, %v1146
        %1148 = vdwg.mxu0
        %1149 = vmatprep.subr.mxu0 0.0
        %1150 = vmatpush1.msra.mxu0 0.0
        %1151 = vmatprep.subr.mxu0 0.0
        %1152 = vmatpush1.msra.mxu0 0.0
        %1153 = vmatprep.subr.mxu0 0.0
        %1154 = vmatpush1.msra.mxu0 0.0
        %1155 = vmatprep.subr.mxu0 0.0
        %1156 = vmatpush1.msra.mxu0 0.0
        %1157 = vmatprep.subr.mxu0 0.0
        %1158 = vmatpush1.msra.mxu0 0.0
        %1159 = vmatprep.subr.mxu0 0.0
        %1160 = vmatpush1.msra.mxu0 0.0
        %1161 = vmatprep.subr.mxu0 0.0
        %1162 = vmatpush1.msra.mxu0 0.0
        %1163 = vmatprep.subr.mxu0 0.0
        %1164 = vmatpush1.msra.mxu0 0.0
        %1165 = vmatprep.subr.mxu0 0.0
        %1166 = vmatpush1.msra.mxu0 0.0
        %1167 = vmatprep.subr.mxu0 0.0
        %1168 = vmatpush1.msra.mxu0 0.0
        %1169 = vmatprep.subr.mxu0 0.0
        %1170 = vmatpush1.msra.mxu0 0.0
        %1171 = vmatprep.subr.mxu0 0.0
        %1172 = vmatpush1.msra.mxu0 0.0
        %1173 = vmatprep.subr.mxu0 0.0
        %1174 = vmatpush1.msra.mxu0 0.0
        %1175 = vmatprep.subr.mxu0 %v679
        %1176 = vmatpush1.msra.mxu0 %v676
        %1177 = vmatprep.subr.mxu0 %v609
        %1178 = vmatpush1.msra.mxu0 %v608
        %1179 = vmatprep.subr.mxu0 %v593
        %1180 = vmatpush1.msra.mxu0 %v592
        %1181 = vmatprep.subr.mxu0 0.0
        %1182 = vmatpush2.msra.mxu0 0.0
        %1183 = vmatprep.subr.mxu0 0.0
        %1184 = vmatpush2.msra.mxu0 0.0
        %1185 = vmatprep.subr.mxu0 0.0
        %1186 = vmatpush2.msra.mxu0 0.0
        %1187 = vmatprep.subr.mxu0 0.0
        %1188 = vmatpush2.msra.mxu0 0.0
        %1189 = vmatprep.subr.mxu0 0.0
        %1190 = vmatpush2.msra.mxu0 0.0
        %1191 = vmatprep.subr.mxu0 0.0
        %1192 = vmatpush2.msra.mxu0 0.0
        %1193 = vmatprep.subr.mxu0 0.0
        %1194 = vmatpush2.msra.mxu0 0.0
        %1195 = vmatprep.subr.mxu0 0.0
        %1196 = vmatpush2.msra.mxu0 0.0
        %1197 = vmatprep.subr.mxu0 0.0
        %1198 = vmatpush2.msra.mxu0 0.0
        %1199 = vmatprep.subr.mxu0 0.0
        %1200 = vmatpush2.msra.mxu0 0.0
        %1201 = vmatprep.subr.mxu0 0.0
        %1202 = vmatpush2.msra.mxu0 0.0
        %1203 = vmatprep.subr.mxu0 0.0
        %1204 = vmatpush2.msra.mxu0 0.0
        %1205 = vmatprep.subr.mxu0 0.0
        %1206 = vmatpush2.msra.mxu0 0.0
        %1207 = vmatprep.subr.mxu0 0.0
        %1208 = vmatpush2.msra.mxu0 0.0
        %1209 = vmatprep.subr.mxu0 0.0
        %1210 = vmatpush2.msra.mxu0 0.0
        %1211 = vmatprep.subr.mxu0 0.0
        %1212 = vmatpush2.msra.mxu0 0.0
        %1213 = vmatprep.mubr.f32.mxu0 0.0
        %1214 = vmatmul.mubr.f32.gmra.mxu0 %v633
        %v1215 = vpop.f32.mrf.mxu0
        %v1216 = vadd.f32 0.0, %v1215
        %v1217 = vpop.f32.mrf.mxu0
        %v1218 = vadd.f32 0.0, %v1217
        %1219 = vmatprep.mubr.f32.mxu0 0.0
        %1220 = vmatmul.mubr.f32.gmra.mxu0 %v636
        %v1221 = vpop.f32.mrf.mxu0
        %v1222 = vadd.f32 0.0, %v1221
        %v1223 = vpop.f32.mrf.mxu0
        %v1224 = vadd.f32 0.0, %v1223
        %1225 = vdwg.mxu0
        %1226 = vmatprep.subr.mxu0 0.0
        %1227 = vmatpush1.msra.mxu0 0.0
        %1228 = vmatprep.subr.mxu0 0.0
        %1229 = vmatpush1.msra.mxu0 0.0
        %1230 = vmatprep.subr.mxu0 0.0
        %1231 = vmatpush1.msra.mxu0 0.0
        %1232 = vmatprep.subr.mxu0 0.0
        %1233 = vmatpush1.msra.mxu0 0.0
        %1234 = vmatprep.subr.mxu0 0.0
        %1235 = vmatpush1.msra.mxu0 0.0
        %1236 = vmatprep.subr.mxu0 0.0
        %1237 = vmatpush1.msra.mxu0 0.0
        %1238 = vmatprep.subr.mxu0 0.0
        %1239 = vmatpush1.msra.mxu0 0.0
        %1240 = vmatprep.subr.mxu0 0.0
        %1241 = vmatpush1.msra.mxu0 0.0
        %1242 = vmatprep.subr.mxu0 0.0
        %1243 = vmatpush1.msra.mxu0 0.0
        %1244 = vmatprep.subr.mxu0 0.0
        %1245 = vmatpush1.msra.mxu0 0.0
        %1246 = vmatprep.subr.mxu0 0.0
        %1247 = vmatpush1.msra.mxu0 0.0
        %1248 = vmatprep.subr.mxu0 0.0
        %1249 = vmatpush1.msra.mxu0 0.0
        %1250 = vmatprep.subr.mxu0 0.0
        %1251 = vmatpush1.msra.mxu0 0.0
        %1252 = vmatprep.subr.mxu0 %v685
        %1253 = vmatpush1.msra.mxu0 %v682
        %1254 = vmatprep.subr.mxu0 %v611
        %1255 = vmatpush1.msra.mxu0 %v610
        %1256 = vmatprep.subr.mxu0 %v595
        %1257 = vmatpush1.msra.mxu0 %v594
        %1258 = vmatprep.subr.mxu0 0.0
        %1259 = vmatpush2.msra.mxu0 0.0
        %1260 = vmatprep.subr.mxu0 0.0
        %1261 = vmatpush2.msra.mxu0 0.0
        %1262 = vmatprep.subr.mxu0 0.0
        %1263 = vmatpush2.msra.mxu0 0.0
        %1264 = vmatprep.subr.mxu0 0.0
        %1265 = vmatpush2.msra.mxu0 0.0
        %1266 = vmatprep.subr.mxu0 0.0
        %1267 = vmatpush2.msra.mxu0 0.0
        %1268 = vmatprep.subr.mxu0 0.0
        %1269 = vmatpush2.msra.mxu0 0.0
        %1270 = vmatprep.subr.mxu0 0.0
        %1271 = vmatpush2.msra.mxu0 0.0
        %1272 = vmatprep.subr.mxu0 0.0
        %1273 = vmatpush2.msra.mxu0 0.0
        %1274 = vmatprep.subr.mxu0 0.0
        %1275 = vmatpush2.msra.mxu0 0.0
        %1276 = vmatprep.subr.mxu0 0.0
        %1277 = vmatpush2.msra.mxu0 0.0
        %1278 = vmatprep.subr.mxu0 0.0
        %1279 = vmatpush2.msra.mxu0 0.0
        %1280 = vmatprep.subr.mxu0 0.0
        %1281 = vmatpush2.msra.mxu0 0.0
        %1282 = vmatprep.subr.mxu0 0.0
        %1283 = vmatpush2.msra.mxu0 0.0
        %1284 = vmatprep.subr.mxu0 0.0
        %1285 = vmatpush2.msra.mxu0 0.0
        %1286 = vmatprep.subr.mxu0 0.0
        %1287 = vmatpush2.msra.mxu0 0.0
        %1288 = vmatprep.subr.mxu0 0.0
        %1289 = vmatpush2.msra.mxu0 0.0
        %1290 = vmatprep.mubr.f32.mxu0 0.0
        %1291 = vmatmul.mubr.f32.gmra.mxu0 %v633
        %v1292 = vpop.f32.mrf.mxu0
        %v1293 = vadd.f32 0.0, %v1292
        %v1294 = vpop.f32.mrf.mxu0
        %v1295 = vadd.f32 0.0, %v1294
        %1296 = vmatprep.mubr.f32.mxu0 0.0
        %1297 = vmatmul.mubr.f32.gmra.mxu0 %v636
        %v1298 = vpop.f32.mrf.mxu0
        %v1299 = vadd.f32 0.0, %v1298
        %v1300 = vpop.f32.mrf.mxu0
        %v1301 = vadd.f32 0.0, %v1300
        %1302 = vdwg.mxu0
        %v1303 = vtanh.pop %v754
        %v1304 = vtanh.pop %v756
        %v1305 = vtanh.pop %v831
        %v1306 = vtanh.pop %v833
        %v1307 = vtanh.pop %v908
        %v1308 = vtanh.pop %v910
        %v1309 = vtanh.pop %v985
        %v1310 = vtanh.pop %v987
        %v1311 = vtanh.pop %v1062
        %v1312 = vtanh.pop %v1064
        %v1313 = vtanh.pop %v1139
        %v1314 = vtanh.pop %v1141
        %v1315 = vtanh.pop %v1216
        %v1316 = vtanh.pop %v1218
        %v1317 = vtanh.pop %v1293
        %v1318 = vtanh.pop %v1295
        %v1319 = vxor.u32 %v760, 2147483648
        %v1320 = vxor.u32 %v762, 2147483648
        %v1321 = vxor.u32 %v837, 2147483648
        %v1322 = vxor.u32 %v839, 2147483648
        %v1323 = vxor.u32 %v914, 2147483648
        %v1324 = vxor.u32 %v916, 2147483648
        %v1325 = vxor.u32 %v991, 2147483648
        %v1326 = vxor.u32 %v993, 2147483648
        %v1327 = vxor.u32 %v1068, 2147483648
        %v1328 = vxor.u32 %v1070, 2147483648
        %v1329 = vxor.u32 %v1145, 2147483648
        %v1330 = vxor.u32 %v1147, 2147483648
        %v1331 = vxor.u32 %v1222, 2147483648
        %v1332 = vxor.u32 %v1224, 2147483648
        %v1333 = vxor.u32 %v1299, 2147483648
        %v1334 = vxor.u32 %v1301, 2147483648
        %v1335 = vmul.f32 %v1319, 1.442695
        %v1336 = vpow.pop %v1335
        %v1337 = vmul.f32 %v1320, 1.442695
        %v1338 = vpow.pop %v1337
        %v1339 = vmul.f32 %v1321, 1.442695
        %v1340 = vpow.pop %v1339
        %v1341 = vmul.f32 %v1322, 1.442695
        %v1342 = vpow.pop %v1341
        %v1343 = vmul.f32 %v1323, 1.442695
        %v1344 = vpow.pop %v1343
        %v1345 = vmul.f32 %v1324, 1.442695
        %v1346 = vpow.pop %v1345
        %v1347 = vmul.f32 %v1325, 1.442695
        %v1348 = vpow.pop %v1347
        %v1349 = vmul.f32 %v1326, 1.442695
        %v1350 = vpow.pop %v1349
        %v1351 = vmul.f32 %v1327, 1.442695
        %v1352 = vpow.pop %v1351
        %v1353 = vmul.f32 %v1328, 1.442695
        %v1354 = vpow.pop %v1353
        %v1355 = vmul.f32 %v1329, 1.442695
        %v1356 = vpow.pop %v1355
        %v1357 = vmul.f32 %v1330, 1.442695
        %v1358 = vpow.pop %v1357
        %v1359 = vmul.f32 %v1331, 1.442695
        %v1360 = vpow.pop %v1359
        %v1361 = vmul.f32 %v1332, 1.442695
        %v1362 = vpow.pop %v1361
        %v1363 = vmul.f32 %v1333, 1.442695
        %v1364 = vpow.pop %v1363
        %v1365 = vmul.f32 %v1334, 1.442695
        %v1366 = vpow.pop %v1365
        %v1367 = vadd.f32 %v1336, 1.0
        %v1368 = vadd.f32 %v1338, 1.0
        %v1369 = vadd.f32 %v1340, 1.0
        %v1370 = vadd.f32 %v1342, 1.0
        %v1371 = vadd.f32 %v1344, 1.0
        %v1372 = vadd.f32 %v1346, 1.0
        %v1373 = vadd.f32 %v1348, 1.0
        %v1374 = vadd.f32 %v1350, 1.0
        %v1375 = vadd.f32 %v1352, 1.0
        %v1376 = vadd.f32 %v1354, 1.0
        %v1377 = vadd.f32 %v1356, 1.0
        %v1378 = vadd.f32 %v1358, 1.0
        %v1379 = vadd.f32 %v1360, 1.0
        %v1380 = vadd.f32 %v1362, 1.0
        %v1381 = vadd.f32 %v1364, 1.0
        %v1382 = vadd.f32 %v1366, 1.0
        %v1383 = vrcp.pop %v1367
        %v1384 = vmul.f32 1.0, %v1383
        %v1385 = vrcp.pop %v1368
        %v1386 = vmul.f32 1.0, %v1385
        %v1387 = vrcp.pop %v1369
        %v1388 = vmul.f32 1.0, %v1387
        %v1389 = vrcp.pop %v1370
        %v1390 = vmul.f32 1.0, %v1389
        %v1391 = vrcp.pop %v1371
        %v1392 = vmul.f32 1.0, %v1391
        %v1393 = vrcp.pop %v1372
        %v1394 = vmul.f32 1.0, %v1393
        %v1395 = vrcp.pop %v1373
        %v1396 = vmul.f32 1.0, %v1395
        %v1397 = vrcp.pop %v1374
        %v1398 = vmul.f32 1.0, %v1397
        %v1399 = vrcp.pop %v1375
        %v1400 = vmul.f32 1.0, %v1399
        %v1401 = vrcp.pop %v1376
        %v1402 = vmul.f32 1.0, %v1401
        %v1403 = vrcp.pop %v1377
        %v1404 = vmul.f32 1.0, %v1403
        %v1405 = vrcp.pop %v1378
        %v1406 = vmul.f32 1.0, %v1405
        %v1407 = vrcp.pop %v1379
        %v1408 = vmul.f32 1.0, %v1407
        %v1409 = vrcp.pop %v1380
        %v1410 = vmul.f32 1.0, %v1409
        %v1411 = vrcp.pop %v1381
        %v1412 = vmul.f32 1.0, %v1411
        %v1413 = vrcp.pop %v1382
        %v1414 = vmul.f32 1.0, %v1413
        %v1415 = vmul.f32 %v1303, %v1384
        %v1416 = vmul.f32 %v1304, %v1386
        %v1417 = vmul.f32 %v1305, %v1388
        %v1418 = vmul.f32 %v1306, %v1390
        %v1419 = vmul.f32 %v1307, %v1392
        %v1420 = vmul.f32 %v1308, %v1394
        %v1421 = vmul.f32 %v1309, %v1396
        %v1422 = vmul.f32 %v1310, %v1398
        %v1423 = vmul.f32 %v1311, %v1400
        %v1424 = vmul.f32 %v1312, %v1402
        %v1425 = vmul.f32 %v1313, %v1404
        %v1426 = vmul.f32 %v1314, %v1406
        %v1427 = vmul.f32 %v1315, %v1408
        %v1428 = vmul.f32 %v1316, %v1410
        %v1429 = vmul.f32 %v1317, %v1412
        %v1430 = vmul.f32 %v1318, %v1414
        %v1431 = vld [vmem:[%s3] sm:$0xff]
        %v1432 = vld [vmem:[%s3 + $0x8] sm:$0xff]
        %v1433 = vld [vmem:[%s3 + $0x10] sm:$0xff]
        %v1434 = vld [vmem:[%s4] sm:$0xff]
        %v1435 = vld [vmem:[%s4 + $0x8] sm:$0xff]
        %v1436 = vld [vmem:[%s4 + $0x10] sm:$0xff]
        %1438 = vset.pattern.permute.xlu0 0
        %1439 = vperm.xlu0 %1438, %v1434
        %v1440 = vpop.permute.xlu0 %1439
        %1443 = vset.pattern.permute.xlu0 0
        %1444 = vperm.xlu0 %1443, %v1435
        %v1445 = vpop.permute.xlu0 %1444
        %1448 = vset.pattern.permute.xlu0 0
        %1449 = vperm.xlu0 %1448, %v1436
        %v1450 = vpop.permute.xlu0 %1449
        %vm1452 = vcmask 64512
        %v1454 = vsel %vm1452, %v1431, 0
        %v1457 = vsel %vm1452, %v1432, 0
        %v1460 = vsel %vm1452, %v1433, 0
        %1462 = vmatprep.subr.mxu0 0.0
        %1463 = vmatpush1.msra.mxu0 0.0
        %1464 = vmatprep.subr.mxu0 0.0
        %1465 = vmatpush1.msra.mxu0 0.0
        %1466 = vmatprep.subr.mxu0 0.0
        %1467 = vmatpush1.msra.mxu0 0.0
        %1468 = vmatprep.subr.mxu0 0.0
        %1469 = vmatpush1.msra.mxu0 0.0
        %1470 = vmatprep.subr.mxu0 0.0
        %1471 = vmatpush1.msra.mxu0 0.0
        %1472 = vmatprep.subr.mxu0 0.0
        %1473 = vmatpush1.msra.mxu0 0.0
        %1474 = vmatprep.subr.mxu0 0.0
        %1475 = vmatpush1.msra.mxu0 0.0
        %1476 = vmatprep.subr.mxu0 0.0
        %1477 = vmatpush1.msra.mxu0 0.0
        %1478 = vmatprep.subr.mxu0 0.0
        %1479 = vmatpush1.msra.mxu0 0.0
        %1480 = vmatprep.subr.mxu0 0.0
        %1481 = vmatpush1.msra.mxu0 0.0
        %1482 = vmatprep.subr.mxu0 0.0
        %1483 = vmatpush1.msra.mxu0 0.0
        %1484 = vmatprep.subr.mxu0 0.0
        %1485 = vmatpush1.msra.mxu0 0.0
        %1486 = vmatprep.subr.mxu0 0.0
        %1487 = vmatpush1.msra.mxu0 0.0
        %1488 = vmatprep.subr.mxu0 0.0
        %1489 = vmatpush1.msra.mxu0 0.0
        %1490 = vmatprep.subr.mxu0 0.0
        %1491 = vmatpush1.msra.mxu0 0.0
        %1492 = vmatprep.subr.mxu0 %v1416
        %1493 = vmatpush1.msra.mxu0 %v1415
        %1494 = vmatprep.subr.mxu0 0.0
        %1495 = vmatpush2.msra.mxu0 0.0
        %1496 = vmatprep.subr.mxu0 0.0
        %1497 = vmatpush2.msra.mxu0 0.0
        %1498 = vmatprep.subr.mxu0 0.0
        %1499 = vmatpush2.msra.mxu0 0.0
        %1500 = vmatprep.subr.mxu0 0.0
        %1501 = vmatpush2.msra.mxu0 0.0
        %1502 = vmatprep.subr.mxu0 0.0
        %1503 = vmatpush2.msra.mxu0 0.0
        %1504 = vmatprep.subr.mxu0 0.0
        %1505 = vmatpush2.msra.mxu0 0.0
        %1506 = vmatprep.subr.mxu0 0.0
        %1507 = vmatpush2.msra.mxu0 0.0
        %1508 = vmatprep.subr.mxu0 0.0
        %1509 = vmatpush2.msra.mxu0 0.0
        %1510 = vmatprep.subr.mxu0 0.0
        %1511 = vmatpush2.msra.mxu0 0.0
        %1512 = vmatprep.subr.mxu0 0.0
        %1513 = vmatpush2.msra.mxu0 0.0
        %1514 = vmatprep.subr.mxu0 0.0
        %1515 = vmatpush2.msra.mxu0 0.0
        %1516 = vmatprep.subr.mxu0 0.0
        %1517 = vmatpush2.msra.mxu0 0.0
        %1518 = vmatprep.subr.mxu0 0.0
        %1519 = vmatpush2.msra.mxu0 0.0
        %1520 = vmatprep.subr.mxu0 0.0
        %1521 = vmatpush2.msra.mxu0 0.0
        %1522 = vmatprep.subr.mxu0 0.0
        %1523 = vmatpush2.msra.mxu0 0.0
        %1524 = vmatprep.subr.mxu0 0.0
        %1525 = vmatpush2.msra.mxu0 0.0
        %1526 = vmatprep.mubr.f32.mxu0 0.0
        %1527 = vmatmul.mubr.f32.gmra.mxu0 %v1454
        %v1528 = vpop.f32.mrf.mxu0
        %v1529 = vadd.f32 %v1440, %v1528
        %v1530 = vpop.f32.mrf.mxu0
        %v1531 = vadd.f32 %v1440, %v1530
        %1532 = vmatprep.mubr.f32.mxu0 0.0
        %1533 = vmatmul.mubr.f32.gmra.mxu0 %v1457
        %v1534 = vpop.f32.mrf.mxu0
        %v1535 = vadd.f32 %v1445, %v1534
        %v1536 = vpop.f32.mrf.mxu0
        %v1537 = vadd.f32 %v1445, %v1536
        %1538 = vmatprep.mubr.f32.mxu0 0.0
        %1539 = vmatmul.mubr.f32.gmra.mxu0 %v1460
        %v1540 = vpop.f32.mrf.mxu0
        %v1541 = vadd.f32 %v1450, %v1540
        %v1542 = vpop.f32.mrf.mxu0
        %v1543 = vadd.f32 %v1450, %v1542
        %1544 = vdwg.mxu0
        %1545 = vmatprep.subr.mxu0 0.0
        %1546 = vmatpush1.msra.mxu0 0.0
        %1547 = vmatprep.subr.mxu0 0.0
        %1548 = vmatpush1.msra.mxu0 0.0
        %1549 = vmatprep.subr.mxu0 0.0
        %1550 = vmatpush1.msra.mxu0 0.0
        %1551 = vmatprep.subr.mxu0 0.0
        %1552 = vmatpush1.msra.mxu0 0.0
        %1553 = vmatprep.subr.mxu0 0.0
        %1554 = vmatpush1.msra.mxu0 0.0
        %1555 = vmatprep.subr.mxu0 0.0
        %1556 = vmatpush1.msra.mxu0 0.0
        %1557 = vmatprep.subr.mxu0 0.0
        %1558 = vmatpush1.msra.mxu0 0.0
        %1559 = vmatprep.subr.mxu0 0.0
        %1560 = vmatpush1.msra.mxu0 0.0
        %1561 = vmatprep.subr.mxu0 0.0
        %1562 = vmatpush1.msra.mxu0 0.0
        %1563 = vmatprep.subr.mxu0 0.0
        %1564 = vmatpush1.msra.mxu0 0.0
        %1565 = vmatprep.subr.mxu0 0.0
        %1566 = vmatpush1.msra.mxu0 0.0
        %1567 = vmatprep.subr.mxu0 0.0
        %1568 = vmatpush1.msra.mxu0 0.0
        %1569 = vmatprep.subr.mxu0 0.0
        %1570 = vmatpush1.msra.mxu0 0.0
        %1571 = vmatprep.subr.mxu0 0.0
        %1572 = vmatpush1.msra.mxu0 0.0
        %1573 = vmatprep.subr.mxu0 0.0
        %1574 = vmatpush1.msra.mxu0 0.0
        %1575 = vmatprep.subr.mxu0 %v1418
        %1576 = vmatpush1.msra.mxu0 %v1417
        %1577 = vmatprep.subr.mxu0 0.0
        %1578 = vmatpush2.msra.mxu0 0.0
        %1579 = vmatprep.subr.mxu0 0.0
        %1580 = vmatpush2.msra.mxu0 0.0
        %1581 = vmatprep.subr.mxu0 0.0
        %1582 = vmatpush2.msra.mxu0 0.0
        %1583 = vmatprep.subr.mxu0 0.0
        %1584 = vmatpush2.msra.mxu0 0.0
        %1585 = vmatprep.subr.mxu0 0.0
        %1586 = vmatpush2.msra.mxu0 0.0
        %1587 = vmatprep.subr.mxu0 0.0
        %1588 = vmatpush2.msra.mxu0 0.0
        %1589 = vmatprep.subr.mxu0 0.0
        %1590 = vmatpush2.msra.mxu0 0.0
        %1591 = vmatprep.subr.mxu0 0.0
        %1592 = vmatpush2.msra.mxu0 0.0
        %1593 = vmatprep.subr.mxu0 0.0
        %1594 = vmatpush2.msra.mxu0 0.0
        %1595 = vmatprep.subr.mxu0 0.0
        %1596 = vmatpush2.msra.mxu0 0.0
        %1597 = vmatprep.subr.mxu0 0.0
        %1598 = vmatpush2.msra.mxu0 0.0
        %1599 = vmatprep.subr.mxu0 0.0
        %1600 = vmatpush2.msra.mxu0 0.0
        %1601 = vmatprep.subr.mxu0 0.0
        %1602 = vmatpush2.msra.mxu0 0.0
        %1603 = vmatprep.subr.mxu0 0.0
        %1604 = vmatpush2.msra.mxu0 0.0
        %1605 = vmatprep.subr.mxu0 0.0
        %1606 = vmatpush2.msra.mxu0 0.0
        %1607 = vmatprep.subr.mxu0 0.0
        %1608 = vmatpush2.msra.mxu0 0.0
        %1609 = vmatprep.mubr.f32.mxu0 0.0
        %1610 = vmatmul.mubr.f32.gmra.mxu0 %v1454
        %v1611 = vpop.f32.mrf.mxu0
        %v1612 = vadd.f32 %v1440, %v1611
        %v1613 = vpop.f32.mrf.mxu0
        %v1614 = vadd.f32 %v1440, %v1613
        %1615 = vmatprep.mubr.f32.mxu0 0.0
        %1616 = vmatmul.mubr.f32.gmra.mxu0 %v1457
        %v1617 = vpop.f32.mrf.mxu0
        %v1618 = vadd.f32 %v1445, %v1617
        %v1619 = vpop.f32.mrf.mxu0
        %v1620 = vadd.f32 %v1445, %v1619
        %1621 = vmatprep.mubr.f32.mxu0 0.0
        %1622 = vmatmul.mubr.f32.gmra.mxu0 %v1460
        %v1623 = vpop.f32.mrf.mxu0
        %v1624 = vadd.f32 %v1450, %v1623
        %v1625 = vpop.f32.mrf.mxu0
        %v1626 = vadd.f32 %v1450, %v1625
        %1627 = vdwg.mxu0
        %1628 = vmatprep.subr.mxu0 0.0
        %1629 = vmatpush1.msra.mxu0 0.0
        %1630 = vmatprep.subr.mxu0 0.0
        %1631 = vmatpush1.msra.mxu0 0.0
        %1632 = vmatprep.subr.mxu0 0.0
        %1633 = vmatpush1.msra.mxu0 0.0
        %1634 = vmatprep.subr.mxu0 0.0
        %1635 = vmatpush1.msra.mxu0 0.0
        %1636 = vmatprep.subr.mxu0 0.0
        %1637 = vmatpush1.msra.mxu0 0.0
        %1638 = vmatprep.subr.mxu0 0.0
        %1639 = vmatpush1.msra.mxu0 0.0
        %1640 = vmatprep.subr.mxu0 0.0
        %1641 = vmatpush1.msra.mxu0 0.0
        %1642 = vmatprep.subr.mxu0 0.0
        %1643 = vmatpush1.msra.mxu0 0.0
        %1644 = vmatprep.subr.mxu0 0.0
        %1645 = vmatpush1.msra.mxu0 0.0
        %1646 = vmatprep.subr.mxu0 0.0
        %1647 = vmatpush1.msra.mxu0 0.0
        %1648 = vmatprep.subr.mxu0 0.0
        %1649 = vmatpush1.msra.mxu0 0.0
        %1650 = vmatprep.subr.mxu0 0.0
        %1651 = vmatpush1.msra.mxu0 0.0
        %1652 = vmatprep.subr.mxu0 0.0
        %1653 = vmatpush1.msra.mxu0 0.0
        %1654 = vmatprep.subr.mxu0 0.0
        %1655 = vmatpush1.msra.mxu0 0.0
        %1656 = vmatprep.subr.mxu0 0.0
        %1657 = vmatpush1.msra.mxu0 0.0
        %1658 = vmatprep.subr.mxu0 %v1420
        %1659 = vmatpush1.msra.mxu0 %v1419
        %1660 = vmatprep.subr.mxu0 0.0
        %1661 = vmatpush2.msra.mxu0 0.0
        %1662 = vmatprep.subr.mxu0 0.0
        %1663 = vmatpush2.msra.mxu0 0.0
        %1664 = vmatprep.subr.mxu0 0.0
        %1665 = vmatpush2.msra.mxu0 0.0
        %1666 = vmatprep.subr.mxu0 0.0
        %1667 = vmatpush2.msra.mxu0 0.0
        %1668 = vmatprep.subr.mxu0 0.0
        %1669 = vmatpush2.msra.mxu0 0.0
        %1670 = vmatprep.subr.mxu0 0.0
        %1671 = vmatpush2.msra.mxu0 0.0
        %1672 = vmatprep.subr.mxu0 0.0
        %1673 = vmatpush2.msra.mxu0 0.0
        %1674 = vmatprep.subr.mxu0 0.0
        %1675 = vmatpush2.msra.mxu0 0.0
        %1676 = vmatprep.subr.mxu0 0.0
        %1677 = vmatpush2.msra.mxu0 0.0
        %1678 = vmatprep.subr.mxu0 0.0
        %1679 = vmatpush2.msra.mxu0 0.0
        %1680 = vmatprep.subr.mxu0 0.0
        %1681 = vmatpush2.msra.mxu0 0.0
        %1682 = vmatprep.subr.mxu0 0.0
        %1683 = vmatpush2.msra.mxu0 0.0
        %1684 = vmatprep.subr.mxu0 0.0
        %1685 = vmatpush2.msra.mxu0 0.0
        %1686 = vmatprep.subr.mxu0 0.0
        %1687 = vmatpush2.msra.mxu0 0.0
        %1688 = vmatprep.subr.mxu0 0.0
        %1689 = vmatpush2.msra.mxu0 0.0
        %1690 = vmatprep.subr.mxu0 0.0
        %1691 = vmatpush2.msra.mxu0 0.0
        %1692 = vmatprep.mubr.f32.mxu0 0.0
        %1693 = vmatmul.mubr.f32.gmra.mxu0 %v1454
        %v1694 = vpop.f32.mrf.mxu0
        %v1695 = vadd.f32 %v1440, %v1694
        %v1696 = vpop.f32.mrf.mxu0
        %v1697 = vadd.f32 %v1440, %v1696
        %1698 = vmatprep.mubr.f32.mxu0 0.0
        %1699 = vmatmul.mubr.f32.gmra.mxu0 %v1457
        %v1700 = vpop.f32.mrf.mxu0
        %v1701 = vadd.f32 %v1445, %v1700
        %v1702 = vpop.f32.mrf.mxu0
        %v1703 = vadd.f32 %v1445, %v1702
        %1704 = vmatprep.mubr.f32.mxu0 0.0
        %1705 = vmatmul.mubr.f32.gmra.mxu0 %v1460
        %v1706 = vpop.f32.mrf.mxu0
        %v1707 = vadd.f32 %v1450, %v1706
        %v1708 = vpop.f32.mrf.mxu0
        %v1709 = vadd.f32 %v1450, %v1708
        %1710 = vdwg.mxu0
        %1711 = vmatprep.subr.mxu0 0.0
        %1712 = vmatpush1.msra.mxu0 0.0
        %1713 = vmatprep.subr.mxu0 0.0
        %1714 = vmatpush1.msra.mxu0 0.0
        %1715 = vmatprep.subr.mxu0 0.0
        %1716 = vmatpush1.msra.mxu0 0.0
        %1717 = vmatprep.subr.mxu0 0.0
        %1718 = vmatpush1.msra.mxu0 0.0
        %1719 = vmatprep.subr.mxu0 0.0
        %1720 = vmatpush1.msra.mxu0 0.0
        %1721 = vmatprep.subr.mxu0 0.0
        %1722 = vmatpush1.msra.mxu0 0.0
        %1723 = vmatprep.subr.mxu0 0.0
        %1724 = vmatpush1.msra.mxu0 0.0
        %1725 = vmatprep.subr.mxu0 0.0
        %1726 = vmatpush1.msra.mxu0 0.0
        %1727 = vmatprep.subr.mxu0 0.0
        %1728 = vmatpush1.msra.mxu0 0.0
        %1729 = vmatprep.subr.mxu0 0.0
        %1730 = vmatpush1.msra.mxu0 0.0
        %1731 = vmatprep.subr.mxu0 0.0
        %1732 = vmatpush1.msra.mxu0 0.0
        %1733 = vmatprep.subr.mxu0 0.0
        %1734 = vmatpush1.msra.mxu0 0.0
        %1735 = vmatprep.subr.mxu0 0.0
        %1736 = vmatpush1.msra.mxu0 0.0
        %1737 = vmatprep.subr.mxu0 0.0
        %1738 = vmatpush1.msra.mxu0 0.0
        %1739 = vmatprep.subr.mxu0 0.0
        %1740 = vmatpush1.msra.mxu0 0.0
        %1741 = vmatprep.subr.mxu0 %v1422
        %1742 = vmatpush1.msra.mxu0 %v1421
        %1743 = vmatprep.subr.mxu0 0.0
        %1744 = vmatpush2.msra.mxu0 0.0
        %1745 = vmatprep.subr.mxu0 0.0
        %1746 = vmatpush2.msra.mxu0 0.0
        %1747 = vmatprep.subr.mxu0 0.0
        %1748 = vmatpush2.msra.mxu0 0.0
        %1749 = vmatprep.subr.mxu0 0.0
        %1750 = vmatpush2.msra.mxu0 0.0
        %1751 = vmatprep.subr.mxu0 0.0
        %1752 = vmatpush2.msra.mxu0 0.0
        %1753 = vmatprep.subr.mxu0 0.0
        %1754 = vmatpush2.msra.mxu0 0.0
        %1755 = vmatprep.subr.mxu0 0.0
        %1756 = vmatpush2.msra.mxu0 0.0
        %1757 = vmatprep.subr.mxu0 0.0
        %1758 = vmatpush2.msra.mxu0 0.0
        %1759 = vmatprep.subr.mxu0 0.0
        %1760 = vmatpush2.msra.mxu0 0.0
        %1761 = vmatprep.subr.mxu0 0.0
        %1762 = vmatpush2.msra.mxu0 0.0
        %1763 = vmatprep.subr.mxu0 0.0
        %1764 = vmatpush2.msra.mxu0 0.0
        %1765 = vmatprep.subr.mxu0 0.0
        %1766 = vmatpush2.msra.mxu0 0.0
        %1767 = vmatprep.subr.mxu0 0.0
        %1768 = vmatpush2.msra.mxu0 0.0
        %1769 = vmatprep.subr.mxu0 0.0
        %1770 = vmatpush2.msra.mxu0 0.0
        %1771 = vmatprep.subr.mxu0 0.0
        %1772 = vmatpush2.msra.mxu0 0.0
        %1773 = vmatprep.subr.mxu0 0.0
        %1774 = vmatpush2.msra.mxu0 0.0
        %1775 = vmatprep.mubr.f32.mxu0 0.0
        %1776 = vmatmul.mubr.f32.gmra.mxu0 %v1454
        %v1777 = vpop.f32.mrf.mxu0
        %v1778 = vadd.f32 %v1440, %v1777
        %v1779 = vpop.f32.mrf.mxu0
        %v1780 = vadd.f32 %v1440, %v1779
        %1781 = vmatprep.mubr.f32.mxu0 0.0
        %1782 = vmatmul.mubr.f32.gmra.mxu0 %v1457
        %v1783 = vpop.f32.mrf.mxu0
        %v1784 = vadd.f32 %v1445, %v1783
        %v1785 = vpop.f32.mrf.mxu0
        %v1786 = vadd.f32 %v1445, %v1785
        %1787 = vmatprep.mubr.f32.mxu0 0.0
        %1788 = vmatmul.mubr.f32.gmra.mxu0 %v1460
        %v1789 = vpop.f32.mrf.mxu0
        %v1790 = vadd.f32 %v1450, %v1789
        %v1791 = vpop.f32.mrf.mxu0
        %v1792 = vadd.f32 %v1450, %v1791
        %1793 = vdwg.mxu0
        %1794 = vmatprep.subr.mxu0 0.0
        %1795 = vmatpush1.msra.mxu0 0.0
        %1796 = vmatprep.subr.mxu0 0.0
        %1797 = vmatpush1.msra.mxu0 0.0
        %1798 = vmatprep.subr.mxu0 0.0
        %1799 = vmatpush1.msra.mxu0 0.0
        %1800 = vmatprep.subr.mxu0 0.0
        %1801 = vmatpush1.msra.mxu0 0.0
        %1802 = vmatprep.subr.mxu0 0.0
        %1803 = vmatpush1.msra.mxu0 0.0
        %1804 = vmatprep.subr.mxu0 0.0
        %1805 = vmatpush1.msra.mxu0 0.0
        %1806 = vmatprep.subr.mxu0 0.0
        %1807 = vmatpush1.msra.mxu0 0.0
        %1808 = vmatprep.subr.mxu0 0.0
        %1809 = vmatpush1.msra.mxu0 0.0
        %1810 = vmatprep.subr.mxu0 0.0
        %1811 = vmatpush1.msra.mxu0 0.0
        %1812 = vmatprep.subr.mxu0 0.0
        %1813 = vmatpush1.msra.mxu0 0.0
        %1814 = vmatprep.subr.mxu0 0.0
        %1815 = vmatpush1.msra.mxu0 0.0
        %1816 = vmatprep.subr.mxu0 0.0
        %1817 = vmatpush1.msra.mxu0 0.0
        %1818 = vmatprep.subr.mxu0 0.0
        %1819 = vmatpush1.msra.mxu0 0.0
        %1820 = vmatprep.subr.mxu0 0.0
        %1821 = vmatpush1.msra.mxu0 0.0
        %1822 = vmatprep.subr.mxu0 0.0
        %1823 = vmatpush1.msra.mxu0 0.0
        %1824 = vmatprep.subr.mxu0 %v1424
        %1825 = vmatpush1.msra.mxu0 %v1423
        %1826 = vmatprep.subr.mxu0 0.0
        %1827 = vmatpush2.msra.mxu0 0.0
        %1828 = vmatprep.subr.mxu0 0.0
        %1829 = vmatpush2.msra.mxu0 0.0
        %1830 = vmatprep.subr.mxu0 0.0
        %1831 = vmatpush2.msra.mxu0 0.0
        %1832 = vmatprep.subr.mxu0 0.0
        %1833 = vmatpush2.msra.mxu0 0.0
        %1834 = vmatprep.subr.mxu0 0.0
        %1835 = vmatpush2.msra.mxu0 0.0
        %1836 = vmatprep.subr.mxu0 0.0
        %1837 = vmatpush2.msra.mxu0 0.0
        %1838 = vmatprep.subr.mxu0 0.0
        %1839 = vmatpush2.msra.mxu0 0.0
        %1840 = vmatprep.subr.mxu0 0.0
        %1841 = vmatpush2.msra.mxu0 0.0
        %1842 = vmatprep.subr.mxu0 0.0
        %1843 = vmatpush2.msra.mxu0 0.0
        %1844 = vmatprep.subr.mxu0 0.0
        %1845 = vmatpush2.msra.mxu0 0.0
        %1846 = vmatprep.subr.mxu0 0.0
        %1847 = vmatpush2.msra.mxu0 0.0
        %1848 = vmatprep.subr.mxu0 0.0
        %1849 = vmatpush2.msra.mxu0 0.0
        %1850 = vmatprep.subr.mxu0 0.0
        %1851 = vmatpush2.msra.mxu0 0.0
        %1852 = vmatprep.subr.mxu0 0.0
        %1853 = vmatpush2.msra.mxu0 0.0
        %1854 = vmatprep.subr.mxu0 0.0
        %1855 = vmatpush2.msra.mxu0 0.0
        %1856 = vmatprep.subr.mxu0 0.0
        %1857 = vmatpush2.msra.mxu0 0.0
        %1858 = vmatprep.mubr.f32.mxu0 0.0
        %1859 = vmatmul.mubr.f32.gmra.mxu0 %v1454
        %v1860 = vpop.f32.mrf.mxu0
        %v1861 = vadd.f32 %v1440, %v1860
        %v1862 = vpop.f32.mrf.mxu0
        %v1863 = vadd.f32 %v1440, %v1862
        %1864 = vmatprep.mubr.f32.mxu0 0.0
        %1865 = vmatmul.mubr.f32.gmra.mxu0 %v1457
        %v1866 = vpop.f32.mrf.mxu0
        %v1867 = vadd.f32 %v1445, %v1866
        %v1868 = vpop.f32.mrf.mxu0
        %v1869 = vadd.f32 %v1445, %v1868
        %1870 = vmatprep.mubr.f32.mxu0 0.0
        %1871 = vmatmul.mubr.f32.gmra.mxu0 %v1460
        %v1872 = vpop.f32.mrf.mxu0
        %v1873 = vadd.f32 %v1450, %v1872
        %v1874 = vpop.f32.mrf.mxu0
        %v1875 = vadd.f32 %v1450, %v1874
        %1876 = vdwg.mxu0
        %1877 = vmatprep.subr.mxu0 0.0
        %1878 = vmatpush1.msra.mxu0 0.0
        %1879 = vmatprep.subr.mxu0 0.0
        %1880 = vmatpush1.msra.mxu0 0.0
        %1881 = vmatprep.subr.mxu0 0.0
        %1882 = vmatpush1.msra.mxu0 0.0
        %1883 = vmatprep.subr.mxu0 0.0
        %1884 = vmatpush1.msra.mxu0 0.0
        %1885 = vmatprep.subr.mxu0 0.0
        %1886 = vmatpush1.msra.mxu0 0.0
        %1887 = vmatprep.subr.mxu0 0.0
        %1888 = vmatpush1.msra.mxu0 0.0
        %1889 = vmatprep.subr.mxu0 0.0
        %1890 = vmatpush1.msra.mxu0 0.0
        %1891 = vmatprep.subr.mxu0 0.0
        %1892 = vmatpush1.msra.mxu0 0.0
        %1893 = vmatprep.subr.mxu0 0.0
        %1894 = vmatpush1.msra.mxu0 0.0
        %1895 = vmatprep.subr.mxu0 0.0
        %1896 = vmatpush1.msra.mxu0 0.0
        %1897 = vmatprep.subr.mxu0 0.0
        %1898 = vmatpush1.msra.mxu0 0.0
        %1899 = vmatprep.subr.mxu0 0.0
        %1900 = vmatpush1.msra.mxu0 0.0
        %1901 = vmatprep.subr.mxu0 0.0
        %1902 = vmatpush1.msra.mxu0 0.0
        %1903 = vmatprep.subr.mxu0 0.0
        %1904 = vmatpush1.msra.mxu0 0.0
        %1905 = vmatprep.subr.mxu0 0.0
        %1906 = vmatpush1.msra.mxu0 0.0
        %1907 = vmatprep.subr.mxu0 %v1426
        %1908 = vmatpush1.msra.mxu0 %v1425
        %1909 = vmatprep.subr.mxu0 0.0
        %1910 = vmatpush2.msra.mxu0 0.0
        %1911 = vmatprep.subr.mxu0 0.0
        %1912 = vmatpush2.msra.mxu0 0.0
        %1913 = vmatprep.subr.mxu0 0.0
        %1914 = vmatpush2.msra.mxu0 0.0
        %1915 = vmatprep.subr.mxu0 0.0
        %1916 = vmatpush2.msra.mxu0 0.0
        %1917 = vmatprep.subr.mxu0 0.0
        %1918 = vmatpush2.msra.mxu0 0.0
        %1919 = vmatprep.subr.mxu0 0.0
        %1920 = vmatpush2.msra.mxu0 0.0
        %1921 = vmatprep.subr.mxu0 0.0
        %1922 = vmatpush2.msra.mxu0 0.0
        %1923 = vmatprep.subr.mxu0 0.0
        %1924 = vmatpush2.msra.mxu0 0.0
        %1925 = vmatprep.subr.mxu0 0.0
        %1926 = vmatpush2.msra.mxu0 0.0
        %1927 = vmatprep.subr.mxu0 0.0
        %1928 = vmatpush2.msra.mxu0 0.0
        %1929 = vmatprep.subr.mxu0 0.0
        %1930 = vmatpush2.msra.mxu0 0.0
        %1931 = vmatprep.subr.mxu0 0.0
        %1932 = vmatpush2.msra.mxu0 0.0
        %1933 = vmatprep.subr.mxu0 0.0
        %1934 = vmatpush2.msra.mxu0 0.0
        %1935 = vmatprep.subr.mxu0 0.0
        %1936 = vmatpush2.msra.mxu0 0.0
        %1937 = vmatprep.subr.mxu0 0.0
        %1938 = vmatpush2.msra.mxu0 0.0
        %1939 = vmatprep.subr.mxu0 0.0
        %1940 = vmatpush2.msra.mxu0 0.0
        %1941 = vmatprep.mubr.f32.mxu0 0.0
        %1942 = vmatmul.mubr.f32.gmra.mxu0 %v1454
        %v1943 = vpop.f32.mrf.mxu0
        %v1944 = vadd.f32 %v1440, %v1943
        %v1945 = vpop.f32.mrf.mxu0
        %v1946 = vadd.f32 %v1440, %v1945
        %1947 = vmatprep.mubr.f32.mxu0 0.0
        %1948 = vmatmul.mubr.f32.gmra.mxu0 %v1457
        %v1949 = vpop.f32.mrf.mxu0
        %v1950 = vadd.f32 %v1445, %v1949
        %v1951 = vpop.f32.mrf.mxu0
        %v1952 = vadd.f32 %v1445, %v1951
        %1953 = vmatprep.mubr.f32.mxu0 0.0
        %1954 = vmatmul.mubr.f32.gmra.mxu0 %v1460
        %v1955 = vpop.f32.mrf.mxu0
        %v1956 = vadd.f32 %v1450, %v1955
        %v1957 = vpop.f32.mrf.mxu0
        %v1958 = vadd.f32 %v1450, %v1957
        %1959 = vdwg.mxu0
        %1960 = vmatprep.subr.mxu0 0.0
        %1961 = vmatpush1.msra.mxu0 0.0
        %1962 = vmatprep.subr.mxu0 0.0
        %1963 = vmatpush1.msra.mxu0 0.0
        %1964 = vmatprep.subr.mxu0 0.0
        %1965 = vmatpush1.msra.mxu0 0.0
        %1966 = vmatprep.subr.mxu0 0.0
        %1967 = vmatpush1.msra.mxu0 0.0
        %1968 = vmatprep.subr.mxu0 0.0
        %1969 = vmatpush1.msra.mxu0 0.0
        %1970 = vmatprep.subr.mxu0 0.0
        %1971 = vmatpush1.msra.mxu0 0.0
        %1972 = vmatprep.subr.mxu0 0.0
        %1973 = vmatpush1.msra.mxu0 0.0
        %1974 = vmatprep.subr.mxu0 0.0
        %1975 = vmatpush1.msra.mxu0 0.0
        %1976 = vmatprep.subr.mxu0 0.0
        %1977 = vmatpush1.msra.mxu0 0.0
        %1978 = vmatprep.subr.mxu0 0.0
        %1979 = vmatpush1.msra.mxu0 0.0
        %1980 = vmatprep.subr.mxu0 0.0
        %1981 = vmatpush1.msra.mxu0 0.0
        %1982 = vmatprep.subr.mxu0 0.0
        %1983 = vmatpush1.msra.mxu0 0.0
        %1984 = vmatprep.subr.mxu0 0.0
        %1985 = vmatpush1.msra.mxu0 0.0
        %1986 = vmatprep.subr.mxu0 0.0
        %1987 = vmatpush1.msra.mxu0 0.0
        %1988 = vmatprep.subr.mxu0 0.0
        %1989 = vmatpush1.msra.mxu0 0.0
        %1990 = vmatprep.subr.mxu0 %v1428
        %1991 = vmatpush1.msra.mxu0 %v1427
        %1992 = vmatprep.subr.mxu0 0.0
        %1993 = vmatpush2.msra.mxu0 0.0
        %1994 = vmatprep.subr.mxu0 0.0
        %1995 = vmatpush2.msra.mxu0 0.0
        %1996 = vmatprep.subr.mxu0 0.0
        %1997 = vmatpush2.msra.mxu0 0.0
        %1998 = vmatprep.subr.mxu0 0.0
        %1999 = vmatpush2.msra.mxu0 0.0
        %2000 = vmatprep.subr.mxu0 0.0
        %2001 = vmatpush2.msra.mxu0 0.0
        %2002 = vmatprep.subr.mxu0 0.0
        %2003 = vmatpush2.msra.mxu0 0.0
        %2004 = vmatprep.subr.mxu0 0.0
        %2005 = vmatpush2.msra.mxu0 0.0
        %2006 = vmatprep.subr.mxu0 0.0
        %2007 = vmatpush2.msra.mxu0 0.0
        %2008 = vmatprep.subr.mxu0 0.0
        %2009 = vmatpush2.msra.mxu0 0.0
        %2010 = vmatprep.subr.mxu0 0.0
        %2011 = vmatpush2.msra.mxu0 0.0
        %2012 = vmatprep.subr.mxu0 0.0
        %2013 = vmatpush2.msra.mxu0 0.0
        %2014 = vmatprep.subr.mxu0 0.0
        %2015 = vmatpush2.msra.mxu0 0.0
        %2016 = vmatprep.subr.mxu0 0.0
        %2017 = vmatpush2.msra.mxu0 0.0
        %2018 = vmatprep.subr.mxu0 0.0
        %2019 = vmatpush2.msra.mxu0 0.0
        %2020 = vmatprep.subr.mxu0 0.0
        %2021 = vmatpush2.msra.mxu0 0.0
        %2022 = vmatprep.subr.mxu0 0.0
        %2023 = vmatpush2.msra.mxu0 0.0
        %2024 = vmatprep.mubr.f32.mxu0 0.0
        %2025 = vmatmul.mubr.f32.gmra.mxu0 %v1454
        %v2026 = vpop.f32.mrf.mxu0
        %v2027 = vadd.f32 %v1440, %v2026
        %v2028 = vpop.f32.mrf.mxu0
        %v2029 = vadd.f32 %v1440, %v2028
        %2030 = vmatprep.mubr.f32.mxu0 0.0
        %2031 = vmatmul.mubr.f32.gmra.mxu0 %v1457
        %v2032 = vpop.f32.mrf.mxu0
        %v2033 = vadd.f32 %v1445, %v2032
        %v2034 = vpop.f32.mrf.mxu0
        %v2035 = vadd.f32 %v1445, %v2034
        %2036 = vmatprep.mubr.f32.mxu0 0.0
        %2037 = vmatmul.mubr.f32.gmra.mxu0 %v1460
        %v2038 = vpop.f32.mrf.mxu0
        %v2039 = vadd.f32 %v1450, %v2038
        %v2040 = vpop.f32.mrf.mxu0
        %v2041 = vadd.f32 %v1450, %v2040
        %2042 = vdwg.mxu0
        %2043 = vmatprep.subr.mxu0 0.0
        %2044 = vmatpush1.msra.mxu0 0.0
        %2045 = vmatprep.subr.mxu0 0.0
        %2046 = vmatpush1.msra.mxu0 0.0
        %2047 = vmatprep.subr.mxu0 0.0
        %2048 = vmatpush1.msra.mxu0 0.0
        %2049 = vmatprep.subr.mxu0 0.0
        %2050 = vmatpush1.msra.mxu0 0.0
        %2051 = vmatprep.subr.mxu0 0.0
        %2052 = vmatpush1.msra.mxu0 0.0
        %2053 = vmatprep.subr.mxu0 0.0
        %2054 = vmatpush1.msra.mxu0 0.0
        %2055 = vmatprep.subr.mxu0 0.0
        %2056 = vmatpush1.msra.mxu0 0.0
        %2057 = vmatprep.subr.mxu0 0.0
        %2058 = vmatpush1.msra.mxu0 0.0
        %2059 = vmatprep.subr.mxu0 0.0
        %2060 = vmatpush1.msra.mxu0 0.0
        %2061 = vmatprep.subr.mxu0 0.0
        %2062 = vmatpush1.msra.mxu0 0.0
        %2063 = vmatprep.subr.mxu0 0.0
        %2064 = vmatpush1.msra.mxu0 0.0
        %2065 = vmatprep.subr.mxu0 0.0
        %2066 = vmatpush1.msra.mxu0 0.0
        %2067 = vmatprep.subr.mxu0 0.0
        %2068 = vmatpush1.msra.mxu0 0.0
        %2069 = vmatprep.subr.mxu0 0.0
        %2070 = vmatpush1.msra.mxu0 0.0
        %2071 = vmatprep.subr.mxu0 0.0
        %2072 = vmatpush1.msra.mxu0 0.0
        %2073 = vmatprep.subr.mxu0 %v1430
        %2074 = vmatpush1.msra.mxu0 %v1429
        %2075 = vmatprep.subr.mxu0 0.0
        %2076 = vmatpush2.msra.mxu0 0.0
        %2077 = vmatprep.subr.mxu0 0.0
        %2078 = vmatpush2.msra.mxu0 0.0
        %2079 = vmatprep.subr.mxu0 0.0
        %2080 = vmatpush2.msra.mxu0 0.0
        %2081 = vmatprep.subr.mxu0 0.0
        %2082 = vmatpush2.msra.mxu0 0.0
        %2083 = vmatprep.subr.mxu0 0.0
        %2084 = vmatpush2.msra.mxu0 0.0
        %2085 = vmatprep.subr.mxu0 0.0
        %2086 = vmatpush2.msra.mxu0 0.0
        %2087 = vmatprep.subr.mxu0 0.0
        %2088 = vmatpush2.msra.mxu0 0.0
        %2089 = vmatprep.subr.mxu0 0.0
        %2090 = vmatpush2.msra.mxu0 0.0
        %2091 = vmatprep.subr.mxu0 0.0
        %2092 = vmatpush2.msra.mxu0 0.0
        %2093 = vmatprep.subr.mxu0 0.0
        %2094 = vmatpush2.msra.mxu0 0.0
        %2095 = vmatprep.subr.mxu0 0.0
        %2096 = vmatpush2.msra.mxu0 0.0
        %2097 = vmatprep.subr.mxu0 0.0
        %2098 = vmatpush2.msra.mxu0 0.0
        %2099 = vmatprep.subr.mxu0 0.0
        %2100 = vmatpush2.msra.mxu0 0.0
        %2101 = vmatprep.subr.mxu0 0.0
        %2102 = vmatpush2.msra.mxu0 0.0
        %2103 = vmatprep.subr.mxu0 0.0
        %2104 = vmatpush2.msra.mxu0 0.0
        %2105 = vmatprep.subr.mxu0 0.0
        %2106 = vmatpush2.msra.mxu0 0.0
        %2107 = vmatprep.mubr.f32.mxu0 0.0
        %2108 = vmatmul.mubr.f32.gmra.mxu0 %v1454
        %v2109 = vpop.f32.mrf.mxu0
        %v2110 = vadd.f32 %v1440, %v2109
        %v2111 = vpop.f32.mrf.mxu0
        %v2112 = vadd.f32 %v1440, %v2111
        %2113 = vmatprep.mubr.f32.mxu0 0.0
        %2114 = vmatmul.mubr.f32.gmra.mxu0 %v1457
        %v2115 = vpop.f32.mrf.mxu0
        %v2116 = vadd.f32 %v1445, %v2115
        %v2117 = vpop.f32.mrf.mxu0
        %v2118 = vadd.f32 %v1445, %v2117
        %2119 = vmatprep.mubr.f32.mxu0 0.0
        %2120 = vmatmul.mubr.f32.gmra.mxu0 %v1460
        %v2121 = vpop.f32.mrf.mxu0
        %v2122 = vadd.f32 %v1450, %v2121
        %v2123 = vpop.f32.mrf.mxu0
        %v2124 = vadd.f32 %v1450, %v2123
        %2125 = vdwg.mxu0
        %2126 = vst [vmem:[%s301] sm:$0xff] %v1529
        %2127 = vst [vmem:[%s301 + $0x8] sm:$0xff] %v1531
        %2128 = vst [vmem:[%s301 + $0x10] sm:$0xff] %v1612
        %2129 = vst [vmem:[%s301 + $0x18] sm:$0xff] %v1614
        %2130 = vst [vmem:[%s301 + $0x20] sm:$0xff] %v1695
        %2131 = vst [vmem:[%s301 + $0x28] sm:$0xff] %v1697
        %2132 = vst [vmem:[%s301 + $0x30] sm:$0xff] %v1778
        %2133 = vst [vmem:[%s301 + $0x38] sm:$0xff] %v1780
        %2134 = vst [vmem:[%s301 + $0x40] sm:$0xff] %v1861
        %2135 = vst [vmem:[%s301 + $0x48] sm:$0xff] %v1863
        %2136 = vst [vmem:[%s301 + $0x50] sm:$0xff] %v1944
        %2137 = vst [vmem:[%s301 + $0x58] sm:$0xff] %v1946
        %2138 = vst [vmem:[%s301 + $0x60] sm:$0xff] %v2027
        %2139 = vst [vmem:[%s301 + $0x68] sm:$0xff] %v2029
        %2140 = vst [vmem:[%s301 + $0x70] sm:$0xff] %v2110
        %2141 = vst [vmem:[%s301 + $0x78] sm:$0xff] %v2112
        %2142 = vst [vmem:[%s308] sm:$0xff] %v1535
        %2143 = vst [vmem:[%s308 + $0x8] sm:$0xff] %v1537
        %2144 = vst [vmem:[%s308 + $0x10] sm:$0xff] %v1618
        %2145 = vst [vmem:[%s308 + $0x18] sm:$0xff] %v1620
        %2146 = vst [vmem:[%s308 + $0x20] sm:$0xff] %v1701
        %2147 = vst [vmem:[%s308 + $0x28] sm:$0xff] %v1703
        %2148 = vst [vmem:[%s308 + $0x30] sm:$0xff] %v1784
        %2149 = vst [vmem:[%s308 + $0x38] sm:$0xff] %v1786
        %2150 = vst [vmem:[%s308 + $0x40] sm:$0xff] %v1867
        %2151 = vst [vmem:[%s308 + $0x48] sm:$0xff] %v1869
        %2152 = vst [vmem:[%s308 + $0x50] sm:$0xff] %v1950
        %2153 = vst [vmem:[%s308 + $0x58] sm:$0xff] %v1952
        %2154 = vst [vmem:[%s308 + $0x60] sm:$0xff] %v2033
        %2155 = vst [vmem:[%s308 + $0x68] sm:$0xff] %v2035
        %2156 = vst [vmem:[%s308 + $0x70] sm:$0xff] %v2116
        %2157 = vst [vmem:[%s308 + $0x78] sm:$0xff] %v2118
        %2158 = vst [vmem:[%s308 + $0x80] sm:$0xff] %v1541
        %2159 = vst [vmem:[%s308 + $0x88] sm:$0xff] %v1543
        %2160 = vst [vmem:[%s308 + $0x90] sm:$0xff] %v1624
        %2161 = vst [vmem:[%s308 + $0x98] sm:$0xff] %v1626
        %2162 = vst [vmem:[%s308 + $0xa0] sm:$0xff] %v1707
        %2163 = vst [vmem:[%s308 + $0xa8] sm:$0xff] %v1709
        %2164 = vst [vmem:[%s308 + $0xb0] sm:$0xff] %v1790
        %2165 = vst [vmem:[%s308 + $0xb8] sm:$0xff] %v1792
        %2166 = vst [vmem:[%s308 + $0xc0] sm:$0xff] %v1873
        %2167 = vst [vmem:[%s308 + $0xc8] sm:$0xff] %v1875
        %2168 = vst [vmem:[%s308 + $0xd0] sm:$0xff] %v1956
        %2169 = vst [vmem:[%s308 + $0xd8] sm:$0xff] %v1958
        %2170 = vst [vmem:[%s308 + $0xe0] sm:$0xff] %v2039
        %2171 = vst [vmem:[%s308 + $0xe8] sm:$0xff] %v2041
        %2172 = vst [vmem:[%s308 + $0xf0] sm:$0xff] %v2122
        %2173 = vst [vmem:[%s308 + $0xf8] sm:$0xff] %v2124
        %s2174 = sand.u32 %s165, 1
        %s2175 = scalar_lea.sflag [#allocation4], %s2174
        %s2176 = sand.u32 %s165, 1
        %s2177 = smul.addr %s2176, 128
        %s2178 = scalar_lea.vmem [#allocation3], %s2177
        %s2179 = sand.u32 %s193, 1
        %s2180 = scalar_lea.sflag [#allocation6], %s2179
        %s2181 = sand.u32 %s193, 1
        %s2182 = smul.addr %s2181, 256
        %s2183 = scalar_lea.vmem [#allocation5], %s2182
        // Predicated region
        $region41: #{tpu_custom_call.1} parent=39 // pred_check
          %p2184 = pneg %p175
        $region42: #{tpu_custom_call.1} parent=39 // pred_check_branch
          %2186 = sbr.rel (%p2184) target = $region44
        $region43: #{tpu_custom_call.1} parent=39 // pred_region
          %s2187 = smul.u32 16, %s29
          %s2189 = ssub.s32 2048, 2048
          %2190 = vsyncadd %s2175, %s2189
          %s2191 = smul.addr %s28, 16
          %s2192 = sadd.s32 %s2187, %s2191
          %s2193 = smul.addr %s2192, 128
          %s2194 = scalar_lea.hbm %s5, %s2193
          %s2196 = sshll.u32 %s2178, 4
          %s2197 = int_to_ptr.vmem [resolvable:$true] %s2196
          %2199 = dma.vmem_to_hbm [thread:$0]  %s2197, 2048, %s2194, %s2175
        $region44: #{tpu_custom_call.1} parent=39 // pred_fallthru
          _
        // Predicated region
        $region45: #{tpu_custom_call.1} parent=39 // pred_check
          %p2200 = pneg %p203
        $region46: #{tpu_custom_call.1} parent=39 // pred_check_branch
          %2202 = sbr.rel (%p2200) target = $region48
        $region47: #{tpu_custom_call.1} parent=39 // pred_region
          %s2203 = smul.u32 16, %s29
          %s2205 = ssub.s32 4096, 4096
          %2206 = vsyncadd %s2180, %s2205
          %s2207 = smul.addr %s28, 32
          %s2208 = sadd.s32 %s2203, %s2207
          %s2209 = smul.addr %s2208, 128
          %s2210 = scalar_lea.hbm %s6, %s2209
          %s2211 = sshll.u32 %s2183, 4
          %s2212 = int_to_ptr.vmem [resolvable:$true] %s2211
          %2217 = dma.vmem_to_hbm [thread:$0]  %s2212, 4096, %s2210, %s2180, 2048, 2048, 128
        $region48: #{tpu_custom_call.1} parent=39 // pred_fallthru
          _
      $region40: #{tpu_custom_call.1} parent=5 // pred_fallthru
        _
      %p2218 = scmp.le.s32.totalorder 2, %s19
      // Predicated region
      $region49: #{tpu_custom_call.1} parent=5 // pred_check
        %p2219 = pneg %p2218
      $region50: #{tpu_custom_call.1} parent=5 // pred_check_branch
        %2221 = sbr.rel (%p2219) target = $region52
      $region51: #{tpu_custom_call.1} parent=5 // pred_region
        %s2222 = ssub.s32 %s19, 2
        // Predicated region
        $region53: #{tpu_custom_call.1} parent=51 // pred_check
          %p2223 = pneg %p181
        $region54: #{tpu_custom_call.1} parent=51 // pred_check_branch
          %2225 = sbr.rel (%p2223) target = $region56
        $region55: #{tpu_custom_call.1} parent=51 // pred_region
          %s2226 = sand.u32 %s166, 1
          %s2227 = scalar_lea.sflag [#allocation4], %s2226
          %s2228 = sand.u32 %s166, 1
          %s2229 = smul.addr %s2228, 128
          %s2230 = scalar_lea.vmem [#allocation3], %s2229
          %2231 = dma.done %s2227, 2048
        $region56: #{tpu_custom_call.1} parent=51 // pred_fallthru
          _
        // Predicated region
        $region57: #{tpu_custom_call.1} parent=51 // pred_check
          %p2232 = pneg %p209
        $region58: #{tpu_custom_call.1} parent=51 // pred_check_branch
          %2234 = sbr.rel (%p2232) target = $region60
        $region59: #{tpu_custom_call.1} parent=51 // pred_region
          %s2235 = sand.u32 %s194, 1
          %s2236 = scalar_lea.sflag [#allocation6], %s2235
          %s2237 = sand.u32 %s194, 1
          %s2238 = smul.addr %s2237, 256
          %s2239 = scalar_lea.vmem [#allocation5], %s2238
          %2240 = dma.done %s2236, 4096
        $region60: #{tpu_custom_call.1} parent=51 // pred_fallthru
          _
      $region52: #{tpu_custom_call.1} parent=5 // pred_fallthru
        _
    $region6: #{tpu_custom_call.1} parent=1 // loop_footer
      %s23 = sadd.s32 1, %s19
    $region7: #{tpu_custom_call.1} parent=1 // loop_footer_branch
      %18 = sbr.rel target = $region3
    $region8: #{tpu_custom_call.1} parent=1 // loop_exit
      _
    %2241 = vsyncpa [#allocation4], 1
    %s2242 = scalar_lea.sflag [#allocation4], 1
    %2243 = vsyncpa %s2242, 1
    %2244 = vsyncpa [#allocation6], 1
    %s2245 = scalar_lea.sflag [#allocation6], 1
    %2246 = vsyncpa %s2245, 1

</llo_original>
